<compile_context>
chip_gen: v7x
topology: tpu7x:2x2x1
jax: 0.10.0
libtpu: 0.0.40
codegen_flags: <defaults>
</compile_context>

<pallas_src>
import functools

import jax
import jax.numpy as jnp
from jax import lax
from jax.experimental import pallas as pl
from jax.experimental.pallas import tpu as pltpu

_LANE = 128
_SUBLANE = 8


def lstm_kernel(idx_ref, len_ref, embproj_ref, whh_ref, wout_ref, bout_ref,
                out_ref, xg_ref):
    # idx_ref:     (B, T)      int32   SMEM (scalar prefetch) token ids
    # len_ref:     (Bp, 1)     int32   sequence lengths (0 for pad rows)
    # embproj_ref: (V, 1, G)   f32     emb @ W_ih_cat + bias  (G = 4*Hp)
    # whh_ref:     (Hp, G)     f32     fused recurrent weights [i|f|g|o]
    # wout_ref:    (Hp, Cp)    f32     classifier (lane-padded)
    # bout_ref:    (1, Cp)     f32     classifier bias (pad lanes = -1e30)
    # out_ref:     (Bp, Cp)    f32     log-probs (lane-dense)
    # xg_ref:      (T*Bp, G)   f32     scratch: per-token gate contributions
    B, T = idx_ref.shape
    Bp = len_ref.shape[0]
    Hp, G = whh_ref.shape

    # Loop-invariant loads, hoisted out of the serial recurrence.
    whh = whh_ref[...]
    lens = len_ref[...]                         # (Bp, 1) int32

    # ---- Fused embedding gather + (already folded) input projection --------
    # Off the recurrence chain: one row gather per real token.
    xg_ref[...] = jnp.zeros_like(xg_ref)        # pad-batch rows -> zero gates
    for t in range(T):
        for b in range(B):
            tok = idx_ref[b, t]                               # SMEM scalar
            xg_ref[pl.ds(t * Bp + b, 1), :] = embproj_ref[tok]  # (1, G)

    h0 = jnp.zeros((Bp, Hp), jnp.float32)
    c0 = jnp.zeros((Bp, Hp), jnp.float32)

    def step(t, carry):
        h, c = carry
        row = pl.multiple_of(t * Bp, _SUBLANE)
        # Gate pre-activations: gathered x-projection (+bias) + one small GEMM.
        gates = xg_ref[pl.ds(row, Bp), :] + jnp.dot(
            h, whh, preferred_element_type=jnp.float32)       # (Bp, G)
        # Full-width nonlinearities (2 EUP issues), then cheap lane slices.
        sg = jax.nn.sigmoid(gates)
        tg = jnp.tanh(gates)
        i = sg[:, 0 * Hp:1 * Hp]
        f = sg[:, 1 * Hp:2 * Hp]
        g = tg[:, 2 * Hp:3 * Hp]
        o = sg[:, 3 * Hp:4 * Hp]
        c_new = f * c + i * g
        h_new = o * jnp.tanh(c_new)
        # pack_padded_sequence semantics: freeze (h, c) past each seq length.
        valid = t < lens                        # (Bp, 1) bool
        return jnp.where(valid, h_new, h), jnp.where(valid, c_new, c)

    # T is small & static -> fully unroll so the LLO scheduler sees the chain.
    h, _ = lax.fori_loop(0, T, step, (h0, c0), unroll=True)

    logits = (jnp.dot(h, wout_ref[...], preferred_element_type=jnp.float32)
              + bout_ref[...])                  # (Bp, Cp), pad lanes ~ -1e30
    m = jnp.max(logits, axis=-1, keepdims=True)
    z = logits - m
    lse = jnp.log(jnp.sum(jnp.exp(z), axis=-1, keepdims=True))
    out_ref[...] = z - lse


def pack_params(emb_table, w_ih, w_hh, bias, w_out, b_out):
    """Repack PyTorch-style LSTM params ONCE, outside the per-call jit path.

    Contract: `bias` is the pre-summed b_ih + b_hh, and w_ih/w_hh/bias are
    stacked per gate in PyTorch [i, f, g, o] order.
    Zero-padding H -> Hp is exact (padded gate columns see zero weights and
    bias, so padded hidden/cell units stay identically zero).
    """
    V, E = emb_table.shape
    H = w_hh.shape[-1]
    C = w_out.shape[-1]
    Hp = ((H + 31) // 32) * 32                  # 4*Hp multiple of 128 lanes
    Cp = ((C + _LANE - 1) // _LANE) * _LANE     # lane-dense classifier
    pad_h = Hp - H

    w_ih_p = jnp.pad(w_ih, ((0, 0), (0, 0), (0, pad_h)))       # (4, E, Hp)
    w_hh_p = jnp.pad(w_hh, ((0, 0), (0, pad_h), (0, pad_h)))   # (4, Hp, Hp)
    bias_p = jnp.pad(bias, ((0, 0), (0, 0), (0, pad_h)))       # (4, 1, Hp)
    # [i | f | g | o] blocks of width Hp along the last (lane) axis.
    w_ih_cat = jnp.transpose(w_ih_p, (1, 0, 2)).reshape(E, 4 * Hp)
    w_hh_cat = jnp.transpose(w_hh_p, (1, 0, 2)).reshape(Hp, 4 * Hp)
    bias_cat = jnp.transpose(bias_p, (1, 0, 2)).reshape(1, 4 * Hp)

    # Fold embedding lookup + input projection + bias into one gather table.
    emb_proj = (jnp.dot(emb_table, w_ih_cat,
                        preferred_element_type=jnp.float32) + bias_cat)
    emb_proj = emb_proj.reshape(V, 1, 4 * Hp)                  # (V, 1, G)

    w_out_p = jnp.pad(w_out, ((0, pad_h), (0, Cp - C)))        # (Hp, Cp)
    # Padded logit lanes get -1e30 so they vanish in max / logsumexp.
    b_out_p = jnp.pad(b_out, ((0, 0), (0, Cp - C)),
                      constant_values=-1e30)                   # (1, Cp)
    return emb_proj, w_hh_cat, w_out_p, b_out_p


@functools.partial(jax.jit, static_argnames=("num_class",))
def lstm_forward(inputs, lengths, emb_proj, w_hh_cat, w_out_p, b_out_p, *,
                 num_class):
    B, T = inputs.shape
    V, _, G = emb_proj.shape
    Hp = w_hh_cat.shape[0]
    Cp = w_out_p.shape[1]
    Bp = ((B + _SUBLANE - 1) // _SUBLANE) * _SUBLANE

    idx = inputs.astype(jnp.int32)                             # (B, T) -> SMEM
    lens = jnp.zeros((Bp, 1), jnp.int32).at[:B, 0].set(
        lengths.astype(jnp.int32))                             # pad rows: len 0

    out = pl.pallas_call(
        lstm_kernel,
        out_shape=jax.ShapeDtypeStruct((Bp, Cp), jnp.float32),
        grid_spec=pltpu.PrefetchScalarGridSpec(
            num_scalar_prefetch=1,          # token ids -> SMEM
            grid=(1,),                      # single step: all operands DMA'd once
            in_specs=[
                pl.BlockSpec((Bp, 1), lambda i, idx_ref: (0, 0)),      # lengths
                pl.BlockSpec((V, 1, G), lambda i, idx_ref: (0, 0, 0)),  # emb_proj
                pl.BlockSpec((Hp, G), lambda i, idx_ref: (0, 0)),      # W_hh fused
                pl.BlockSpec((Hp, Cp), lambda i, idx_ref: (0, 0)),     # W_out
                pl.BlockSpec((1, Cp), lambda i, idx_ref: (0, 0)),      # b_out
            ],
            out_specs=pl.BlockSpec((Bp, Cp), lambda i, idx_ref: (0, 0)),
            scratch_shapes=[pltpu.VMEM((T * Bp, G), jnp.float32)],
        ),
        compiler_params=pltpu.CompilerParams(
            dimension_semantics=("arbitrary",)),
    )(idx, lens, emb_proj, w_hh_cat, w_out_p, b_out_p)
    return out[:B, :num_class]


def reference_forward(inputs, lengths, emb_table, w_ih, w_hh, bias, w_out, b_out):
    embeds = jnp.take(emb_table, inputs, axis=0)   # (B, T, E)
    B, T, _ = embeds.shape
    H = w_hh.shape[-1]
    h = jnp.zeros((B, H), jnp.float32)
    c = jnp.zeros((B, H), jnp.float32)
    for t in range(T):
        x_t = embeds[:, t]
        gi = x_t @ w_ih[0] + h @ w_hh[0] + bias[0]
        gf = x_t @ w_ih[1] + h @ w_hh[1] + bias[1]
        gg = x_t @ w_ih[2] + h @ w_hh[2] + bias[2]
        go = x_t @ w_ih[3] + h @ w_hh[3] + bias[3]
        i, f = jax.nn.sigmoid(gi), jax.nn.sigmoid(gf)
        g, o = jnp.tanh(gg), jax.nn.sigmoid(go)
        c_new = f * c + i * g
        h_new = o * jnp.tanh(c_new)
        m = (t < lengths)[:, None].astype(jnp.float32)
        h = m * h_new + (1.0 - m) * h
        c = m * c_new + (1.0 - m) * c
    logits = h @ w_out + b_out
    return jax.nn.log_softmax(logits, axis=-1)


if __name__ == "__main__":
    vocab_size = 100
    embedding_dim = 128
    hidden_dim = 24
    num_class = 2
    B, T = 2, 8

    key = jax.random.PRNGKey(0)
    keys = jax.random.split(key, 8)
    k = 1.0 / jnp.sqrt(hidden_dim)

    emb_table = jax.random.normal(keys[0], (vocab_size, embedding_dim), jnp.float32)
    # PyTorch LSTM weights: weight_ih (4H, E), weight_hh (4H, H) stacked & transposed.
    w_ih = jax.random.uniform(keys[1], (4, embedding_dim, hidden_dim),
                              jnp.float32, -k, k)
    w_hh = jax.random.uniform(keys[2], (4, hidden_dim, hidden_dim),
                              jnp.float32, -k, k)
    bias = (jax.random.uniform(keys[3], (4, 1, hidden_dim), jnp.float32, -k, k)
            + jax.random.uniform(keys[4], (4, 1, hidden_dim), jnp.float32, -k, k))
    w_out = jax.random.uniform(keys[5], (hidden_dim, num_class), jnp.float32, -k, k)
    b_out = jax.random.uniform(keys[6], (1, num_class), jnp.float32, -k, k)

    inputs = jax.random.randint(keys[7], (B, T), 0, vocab_size, jnp.int32)
    lengths = jnp.array([T, 5], dtype=jnp.int32)   # variable-length sequences

    # Pack weights ONCE (outside the per-call jit path).
    packed = pack_params(emb_table, w_ih, w_hh, bias, w_out, b_out)
    packed = jax.block_until_ready(packed)

    log_probs = lstm_forward(inputs, lengths, *packed, num_class=num_class)
    jax.block_until_ready(log_probs)

    ref = reference_forward(inputs, lengths, emb_table, w_ih, w_hh, bias,
                            w_out, b_out)
    assert log_probs.shape == (B, num_class)
    assert jnp.allclose(log_probs, ref, atol=1e-5, rtol=1e-5), (log_probs, ref)

    print("KERNEL_OK")
</pallas_src>

<mosaic_0001>
module attributes {stable_mosaic.version = 11 : i64} {
  func.func @lstm_kernel(%arg0: i32, %arg1: memref<2x8xi32, #tpu.memory_space<smem>>, %arg2: memref<8x1xi32, #tpu.memory_space<vmem>>, %arg3: memref<100x1x128xf32, #tpu.memory_space<vmem>>, %arg4: memref<32x128xf32, #tpu.memory_space<vmem>>, %arg5: memref<32x128xf32, #tpu.memory_space<vmem>>, %arg6: memref<1x128xf32, #tpu.memory_space<vmem>>, %arg7: memref<8x128xf32, #tpu.memory_space<vmem>>, %arg8: memref<64x128xf32, #tpu.memory_space<vmem>>) attributes {dimension_semantics = [#tpu.dimension_semantics<arbitrary>], iteration_bounds = array<i64: 1>, scalar_prefetch = 1 : i64, scratch_operands = 1 : i64, tpu.core_type = #tpu.core_type<tc>, window_params = [{pipeline_mode = #tpu.pipeline_mode<synchronous>, transform_indices = @transform_0, window_bounds = array<i64: 8, 1>}, {pipeline_mode = #tpu.pipeline_mode<synchronous>, transform_indices = @transform_1, window_bounds = array<i64: 100, 1, 128>}, {pipeline_mode = #tpu.pipeline_mode<synchronous>, transform_indices = @transform_2, window_bounds = array<i64: 32, 128>}, {pipeline_mode = #tpu.pipeline_mode<synchronous>, transform_indices = @transform_3, window_bounds = array<i64: 32, 128>}, {pipeline_mode = #tpu.pipeline_mode<synchronous>, transform_indices = @transform_4, window_bounds = array<i64: 1, 128>}, {pipeline_mode = #tpu.pipeline_mode<synchronous>, transform_indices = @transform_5, window_bounds = array<i64: 8, 128>}]} {
    %c0 = arith.constant 0 : index
    %c0_0 = arith.constant 0 : index
    %0 = vector.load %arg4[%c0, %c0_0] : memref<32x128xf32, #tpu.memory_space<vmem>>, vector<32x128xf32>
    %c0_1 = arith.constant 0 : index
    %c0_2 = arith.constant 0 : index
    %1 = vector.load %arg2[%c0_1, %c0_2] : memref<8x1xi32, #tpu.memory_space<vmem>>, vector<8x1xi32>
    %cst = arith.constant 0.000000e+00 : f32
    %2 = vector.broadcast %cst : f32 to vector<64x128xf32>
    %c0_3 = arith.constant 0 : index
    %c0_4 = arith.constant 0 : index
    %3 = vector.load %arg8[%c0_3, %c0_4] : memref<64x128xf32, #tpu.memory_space<vmem>>, vector<64x128xf32>
    tpu.vector_store %arg8[%c0_3, %c0_4], %2 {strides = array<i32>} : memref<64x128xf32, #tpu.memory_space<vmem>>, vector<64x128xf32>,
    %c0_5 = arith.constant 0 : index
    %c0_6 = arith.constant 0 : index
    %4 = memref.load %arg1[%c0_5, %c0_6] : memref<2x8xi32, #tpu.memory_space<smem>>
    %5 = arith.index_cast %4 : i32 to index
    %c0_7 = arith.constant 0 : index
    %c0_8 = arith.constant 0 : index
    %6 = vector.load %arg3[%5, %c0_7, %c0_8] : memref<100x1x128xf32, #tpu.memory_space<vmem>>, vector<1x1x128xf32>
    %7 = vector.shape_cast %6 : vector<1x1x128xf32> to vector<1x128xf32>
    %c0_9 = arith.constant 0 : index
    %c0_10 = arith.constant 0 : index
    %8 = vector.load %arg8[%c0_9, %c0_10] : memref<64x128xf32, #tpu.memory_space<vmem>>, vector<1x128xf32>
    tpu.vector_store %arg8[%c0_9, %c0_10], %7 {strides = array<i32>} : memref<64x128xf32, #tpu.memory_space<vmem>>, vector<1x128xf32>,
    %c1 = arith.constant 1 : index
    %c0_11 = arith.constant 0 : index
    %9 = memref.load %arg1[%c1, %c0_11] : memref<2x8xi32, #tpu.memory_space<smem>>
    %10 = arith.index_cast %9 : i32 to index
    %c0_12 = arith.constant 0 : index
    %c0_13 = arith.constant 0 : index
    %11 = vector.load %arg3[%10, %c0_12, %c0_13] : memref<100x1x128xf32, #tpu.memory_space<vmem>>, vector<1x1x128xf32>
    %12 = vector.shape_cast %11 : vector<1x1x128xf32> to vector<1x128xf32>
    %c1_14 = arith.constant 1 : index
    %c0_15 = arith.constant 0 : index
    %13 = vector.load %arg8[%c1_14, %c0_15] : memref<64x128xf32, #tpu.memory_space<vmem>>, vector<1x128xf32>
    tpu.vector_store %arg8[%c1_14, %c0_15], %12 {strides = array<i32>} : memref<64x128xf32, #tpu.memory_space<vmem>>, vector<1x128xf32>,
    %c0_16 = arith.constant 0 : index
    %c1_17 = arith.constant 1 : index
    %14 = memref.load %arg1[%c0_16, %c1_17] : memref<2x8xi32, #tpu.memory_space<smem>>
    %15 = arith.index_cast %14 : i32 to index
    %c0_18 = arith.constant 0 : index
    %c0_19 = arith.constant 0 : index
    %16 = vector.load %arg3[%15, %c0_18, %c0_19] : memref<100x1x128xf32, #tpu.memory_space<vmem>>, vector<1x1x128xf32>
    %17 = vector.shape_cast %16 : vector<1x1x128xf32> to vector<1x128xf32>
    %c8 = arith.constant 8 : index
    %c0_20 = arith.constant 0 : index
    %18 = vector.load %arg8[%c8, %c0_20] : memref<64x128xf32, #tpu.memory_space<vmem>>, vector<1x128xf32>
    tpu.vector_store %arg8[%c8, %c0_20], %17 {strides = array<i32>} : memref<64x128xf32, #tpu.memory_space<vmem>>, vector<1x128xf32>,
    %c1_21 = arith.constant 1 : index
    %c1_22 = arith.constant 1 : index
    %19 = memref.load %arg1[%c1_21, %c1_22] : memref<2x8xi32, #tpu.memory_space<smem>>
    %20 = arith.index_cast %19 : i32 to index
    %c0_23 = arith.constant 0 : index
    %c0_24 = arith.constant 0 : index
    %21 = vector.load %arg3[%20, %c0_23, %c0_24] : memref<100x1x128xf32, #tpu.memory_space<vmem>>, vector<1x1x128xf32>
    %22 = vector.shape_cast %21 : vector<1x1x128xf32> to vector<1x128xf32>
    %c9 = arith.constant 9 : index
    %c0_25 = arith.constant 0 : index
    %23 = vector.load %arg8[%c9, %c0_25] : memref<64x128xf32, #tpu.memory_space<vmem>>, vector<1x128xf32>
    tpu.vector_store %arg8[%c9, %c0_25], %22 {strides = array<i32>} : memref<64x128xf32, #tpu.memory_space<vmem>>, vector<1x128xf32>,
    %c0_26 = arith.constant 0 : index
    %c2 = arith.constant 2 : index
    %24 = memref.load %arg1[%c0_26, %c2] : memref<2x8xi32, #tpu.memory_space<smem>>
    %25 = arith.index_cast %24 : i32 to index
    %c0_27 = arith.constant 0 : index
    %c0_28 = arith.constant 0 : index
    %26 = vector.load %arg3[%25, %c0_27, %c0_28] : memref<100x1x128xf32, #tpu.memory_space<vmem>>, vector<1x1x128xf32>
    %27 = vector.shape_cast %26 : vector<1x1x128xf32> to vector<1x128xf32>
    %c16 = arith.constant 16 : index
    %c0_29 = arith.constant 0 : index
    %28 = vector.load %arg8[%c16, %c0_29] : memref<64x128xf32, #tpu.memory_space<vmem>>, vector<1x128xf32>
    tpu.vector_store %arg8[%c16, %c0_29], %27 {strides = array<i32>} : memref<64x128xf32, #tpu.memory_space<vmem>>, vector<1x128xf32>,
    %c1_30 = arith.constant 1 : index
    %c2_31 = arith.constant 2 : index
    %29 = memref.load %arg1[%c1_30, %c2_31] : memref<2x8xi32, #tpu.memory_space<smem>>
    %30 = arith.index_cast %29 : i32 to index
    %c0_32 = arith.constant 0 : index
    %c0_33 = arith.constant 0 : index
    %31 = vector.load %arg3[%30, %c0_32, %c0_33] : memref<100x1x128xf32, #tpu.memory_space<vmem>>, vector<1x1x128xf32>
    %32 = vector.shape_cast %31 : vector<1x1x128xf32> to vector<1x128xf32>
    %c17 = arith.constant 17 : index
    %c0_34 = arith.constant 0 : index
    %33 = vector.load %arg8[%c17, %c0_34] : memref<64x128xf32, #tpu.memory_space<vmem>>, vector<1x128xf32>
    tpu.vector_store %arg8[%c17, %c0_34], %32 {strides = array<i32>} : memref<64x128xf32, #tpu.memory_space<vmem>>, vector<1x128xf32>,
    %c0_35 = arith.constant 0 : index
    %c3 = arith.constant 3 : index
    %34 = memref.load %arg1[%c0_35, %c3] : memref<2x8xi32, #tpu.memory_space<smem>>
    %35 = arith.index_cast %34 : i32 to index
    %c0_36 = arith.constant 0 : index
    %c0_37 = arith.constant 0 : index
    %36 = vector.load %arg3[%35, %c0_36, %c0_37] : memref<100x1x128xf32, #tpu.memory_space<vmem>>, vector<1x1x128xf32>
    %37 = vector.shape_cast %36 : vector<1x1x128xf32> to vector<1x128xf32>
    %c24 = arith.constant 24 : index
    %c0_38 = arith.constant 0 : index
    %38 = vector.load %arg8[%c24, %c0_38] : memref<64x128xf32, #tpu.memory_space<vmem>>, vector<1x128xf32>
    tpu.vector_store %arg8[%c24, %c0_38], %37 {strides = array<i32>} : memref<64x128xf32, #tpu.memory_space<vmem>>, vector<1x128xf32>,
    %c1_39 = arith.constant 1 : index
    %c3_40 = arith.constant 3 : index
    %39 = memref.load %arg1[%c1_39, %c3_40] : memref<2x8xi32, #tpu.memory_space<smem>>
    %40 = arith.index_cast %39 : i32 to index
    %c0_41 = arith.constant 0 : index
    %c0_42 = arith.constant 0 : index
    %41 = vector.load %arg3[%40, %c0_41, %c0_42] : memref<100x1x128xf32, #tpu.memory_space<vmem>>, vector<1x1x128xf32>
    %42 = vector.shape_cast %41 : vector<1x1x128xf32> to vector<1x128xf32>
    %c25 = arith.constant 25 : index
    %c0_43 = arith.constant 0 : index
    %43 = vector.load %arg8[%c25, %c0_43] : memref<64x128xf32, #tpu.memory_space<vmem>>, vector<1x128xf32>
    tpu.vector_store %arg8[%c25, %c0_43], %42 {strides = array<i32>} : memref<64x128xf32, #tpu.memory_space<vmem>>, vector<1x128xf32>,
    %c0_44 = arith.constant 0 : index
    %c4 = arith.constant 4 : index
    %44 = memref.load %arg1[%c0_44, %c4] : memref<2x8xi32, #tpu.memory_space<smem>>
    %45 = arith.index_cast %44 : i32 to index
    %c0_45 = arith.constant 0 : index
    %c0_46 = arith.constant 0 : index
    %46 = vector.load %arg3[%45, %c0_45, %c0_46] : memref<100x1x128xf32, #tpu.memory_space<vmem>>, vector<1x1x128xf32>
    %47 = vector.shape_cast %46 : vector<1x1x128xf32> to vector<1x128xf32>
    %c32 = arith.constant 32 : index
    %c0_47 = arith.constant 0 : index
    %48 = vector.load %arg8[%c32, %c0_47] : memref<64x128xf32, #tpu.memory_space<vmem>>, vector<1x128xf32>
    tpu.vector_store %arg8[%c32, %c0_47], %47 {strides = array<i32>} : memref<64x128xf32, #tpu.memory_space<vmem>>, vector<1x128xf32>,
    %c1_48 = arith.constant 1 : index
    %c4_49 = arith.constant 4 : index
    %49 = memref.load %arg1[%c1_48, %c4_49] : memref<2x8xi32, #tpu.memory_space<smem>>
    %50 = arith.index_cast %49 : i32 to index
    %c0_50 = arith.constant 0 : index
    %c0_51 = arith.constant 0 : index
    %51 = vector.load %arg3[%50, %c0_50, %c0_51] : memref<100x1x128xf32, #tpu.memory_space<vmem>>, vector<1x1x128xf32>
    %52 = vector.shape_cast %51 : vector<1x1x128xf32> to vector<1x128xf32>
    %c33 = arith.constant 33 : index
    %c0_52 = arith.constant 0 : index
    %53 = vector.load %arg8[%c33, %c0_52] : memref<64x128xf32, #tpu.memory_space<vmem>>, vector<1x128xf32>
    tpu.vector_store %arg8[%c33, %c0_52], %52 {strides = array<i32>} : memref<64x128xf32, #tpu.memory_space<vmem>>, vector<1x128xf32>,
    %c0_53 = arith.constant 0 : index
    %c5 = arith.constant 5 : index
    %54 = memref.load %arg1[%c0_53, %c5] : memref<2x8xi32, #tpu.memory_space<smem>>
    %55 = arith.index_cast %54 : i32 to index
    %c0_54 = arith.constant 0 : index
    %c0_55 = arith.constant 0 : index
    %56 = vector.load %arg3[%55, %c0_54, %c0_55] : memref<100x1x128xf32, #tpu.memory_space<vmem>>, vector<1x1x128xf32>
    %57 = vector.shape_cast %56 : vector<1x1x128xf32> to vector<1x128xf32>
    %c40 = arith.constant 40 : index
    %c0_56 = arith.constant 0 : index
    %58 = vector.load %arg8[%c40, %c0_56] : memref<64x128xf32, #tpu.memory_space<vmem>>, vector<1x128xf32>
    tpu.vector_store %arg8[%c40, %c0_56], %57 {strides = array<i32>} : memref<64x128xf32, #tpu.memory_space<vmem>>, vector<1x128xf32>,
    %c1_57 = arith.constant 1 : index
    %c5_58 = arith.constant 5 : index
    %59 = memref.load %arg1[%c1_57, %c5_58] : memref<2x8xi32, #tpu.memory_space<smem>>
    %60 = arith.index_cast %59 : i32 to index
    %c0_59 = arith.constant 0 : index
    %c0_60 = arith.constant 0 : index
    %61 = vector.load %arg3[%60, %c0_59, %c0_60] : memref<100x1x128xf32, #tpu.memory_space<vmem>>, vector<1x1x128xf32>
    %62 = vector.shape_cast %61 : vector<1x1x128xf32> to vector<1x128xf32>
    %c41 = arith.constant 41 : index
    %c0_61 = arith.constant 0 : index
    %63 = vector.load %arg8[%c41, %c0_61] : memref<64x128xf32, #tpu.memory_space<vmem>>, vector<1x128xf32>
    tpu.vector_store %arg8[%c41, %c0_61], %62 {strides = array<i32>} : memref<64x128xf32, #tpu.memory_space<vmem>>, vector<1x128xf32>,
    %c0_62 = arith.constant 0 : index
    %c6 = arith.constant 6 : index
    %64 = memref.load %arg1[%c0_62, %c6] : memref<2x8xi32, #tpu.memory_space<smem>>
    %65 = arith.index_cast %64 : i32 to index
    %c0_63 = arith.constant 0 : index
    %c0_64 = arith.constant 0 : index
    %66 = vector.load %arg3[%65, %c0_63, %c0_64] : memref<100x1x128xf32, #tpu.memory_space<vmem>>, vector<1x1x128xf32>
    %67 = vector.shape_cast %66 : vector<1x1x128xf32> to vector<1x128xf32>
    %c48 = arith.constant 48 : index
    %c0_65 = arith.constant 0 : index
    %68 = vector.load %arg8[%c48, %c0_65] : memref<64x128xf32, #tpu.memory_space<vmem>>, vector<1x128xf32>
    tpu.vector_store %arg8[%c48, %c0_65], %67 {strides = array<i32>} : memref<64x128xf32, #tpu.memory_space<vmem>>, vector<1x128xf32>,
    %c1_66 = arith.constant 1 : index
    %c6_67 = arith.constant 6 : index
    %69 = memref.load %arg1[%c1_66, %c6_67] : memref<2x8xi32, #tpu.memory_space<smem>>
    %70 = arith.index_cast %69 : i32 to index
    %c0_68 = arith.constant 0 : index
    %c0_69 = arith.constant 0 : index
    %71 = vector.load %arg3[%70, %c0_68, %c0_69] : memref<100x1x128xf32, #tpu.memory_space<vmem>>, vector<1x1x128xf32>
    %72 = vector.shape_cast %71 : vector<1x1x128xf32> to vector<1x128xf32>
    %c49 = arith.constant 49 : index
    %c0_70 = arith.constant 0 : index
    %73 = vector.load %arg8[%c49, %c0_70] : memref<64x128xf32, #tpu.memory_space<vmem>>, vector<1x128xf32>
    tpu.vector_store %arg8[%c49, %c0_70], %72 {strides = array<i32>} : memref<64x128xf32, #tpu.memory_space<vmem>>, vector<1x128xf32>,
    %c0_71 = arith.constant 0 : index
    %c7 = arith.constant 7 : index
    %74 = memref.load %arg1[%c0_71, %c7] : memref<2x8xi32, #tpu.memory_space<smem>>
    %75 = arith.index_cast %74 : i32 to index
    %c0_72 = arith.constant 0 : index
    %c0_73 = arith.constant 0 : index
    %76 = vector.load %arg3[%75, %c0_72, %c0_73] : memref<100x1x128xf32, #tpu.memory_space<vmem>>, vector<1x1x128xf32>
    %77 = vector.shape_cast %76 : vector<1x1x128xf32> to vector<1x128xf32>
    %c56 = arith.constant 56 : index
    %c0_74 = arith.constant 0 : index
    %78 = vector.load %arg8[%c56, %c0_74] : memref<64x128xf32, #tpu.memory_space<vmem>>, vector<1x128xf32>
    tpu.vector_store %arg8[%c56, %c0_74], %77 {strides = array<i32>} : memref<64x128xf32, #tpu.memory_space<vmem>>, vector<1x128xf32>,
    %c1_75 = arith.constant 1 : index
    %c7_76 = arith.constant 7 : index
    %79 = memref.load %arg1[%c1_75, %c7_76] : memref<2x8xi32, #tpu.memory_space<smem>>
    %80 = arith.index_cast %79 : i32 to index
    %c0_77 = arith.constant 0 : index
    %c0_78 = arith.constant 0 : index
    %81 = vector.load %arg3[%80, %c0_77, %c0_78] : memref<100x1x128xf32, #tpu.memory_space<vmem>>, vector<1x1x128xf32>
    %82 = vector.shape_cast %81 : vector<1x1x128xf32> to vector<1x128xf32>
    %c57 = arith.constant 57 : index
    %c0_79 = arith.constant 0 : index
    %83 = vector.load %arg8[%c57, %c0_79] : memref<64x128xf32, #tpu.memory_space<vmem>>, vector<1x128xf32>
    tpu.vector_store %arg8[%c57, %c0_79], %82 {strides = array<i32>} : memref<64x128xf32, #tpu.memory_space<vmem>>, vector<1x128xf32>,
    %cst_80 = arith.constant 0.000000e+00 : f32
    %84 = vector.broadcast %cst_80 : f32 to vector<8x32xf32>
    %cst_81 = arith.constant 0.000000e+00 : f32
    %85 = vector.broadcast %cst_81 : f32 to vector<8x32xf32>
    %c0_i32 = arith.constant 0 : i32
    %c8_i32 = arith.constant 8 : i32
    %86 = arith.muli %c0_i32, %c8_i32 : i32
    %87 = tpu.assume_multiple %86, 8 : i32
    %88 = arith.index_cast %87 : i32 to index
    %c0_82 = arith.constant 0 : index
    %89 = vector.load %arg8[%88, %c0_82] : memref<64x128xf32, #tpu.memory_space<vmem>>, vector<8x128xf32>
    %cst_83 = arith.constant dense<0.000000e+00> : vector<8x128xf32>
    %90 = tpu.matmul %84, %0, %cst_83 {dimension_numbers = #tpu.dot_dimension_numbers<[1], [0], [0], [1], [0, 0, 1, 1], [], []>} : vector<8x32xf32>, vector<32x128xf32>, vector<8x128xf32> -> vector<8x128xf32>
    %91 = arith.addf %89, %90 : vector<8x128xf32>
    %92 = arith.negf %91 : vector<8x128xf32>
    %93 = math.exp %92 : vector<8x128xf32>
    %cst_84 = arith.constant 1.000000e+00 : f32
    %94 = vector.broadcast %cst_84 : f32 to vector<8x128xf32>
    %95 = arith.addf %94, %93 : vector<8x128xf32>
    %96 = arith.divf %94, %95 : vector<8x128xf32>
    %97 = math.tanh %91 : vector<8x128xf32>
    %98 = vector.extract_strided_slice %96 {offsets = [0, 0], sizes = [8, 32], strides = [1, 1]} : vector<8x128xf32> to vector<8x32xf32>
    %99 = vector.extract_strided_slice %96 {offsets = [0, 32], sizes = [8, 32], strides = [1, 1]} : vector<8x128xf32> to vector<8x32xf32>
    %100 = vector.extract_strided_slice %97 {offsets = [0, 64], sizes = [8, 32], strides = [1, 1]} : vector<8x128xf32> to vector<8x32xf32>
    %101 = vector.extract_strided_slice %96 {offsets = [0, 96], sizes = [8, 32], strides = [1, 1]} : vector<8x128xf32> to vector<8x32xf32>
    %102 = arith.mulf %99, %85 : vector<8x32xf32>
    %103 = arith.mulf %98, %100 : vector<8x32xf32>
    %104 = arith.addf %102, %103 : vector<8x32xf32>
    %105 = math.tanh %104 : vector<8x32xf32>
    %106 = arith.mulf %101, %105 : vector<8x32xf32>
    %107 = vector.broadcast %c0_i32 : i32 to vector<8x1xi32>
    %108 = arith.cmpi slt, %107, %1 : vector<8x1xi32>
    %109 = vector.shape_cast %108 : vector<8x1xi1> to vector<8x1xi1>
    %110 = vector.broadcast %109 : vector<8x1xi1> to vector<8x32xi1>
    %111 = arith.select %110, %106, %84 : vector<8x32xi1>, vector<8x32xf32>
    %112 = vector.shape_cast %108 : vector<8x1xi1> to vector<8x1xi1>
    %113 = vector.broadcast %112 : vector<8x1xi1> to vector<8x32xi1>
    %114 = arith.select %113, %104, %85 : vector<8x32xi1>, vector<8x32xf32>
    %c1_i32 = arith.constant 1 : i32
    %c8_i32_85 = arith.constant 8 : i32
    %115 = arith.muli %c1_i32, %c8_i32_85 : i32
    %116 = tpu.assume_multiple %115, 8 : i32
    %117 = arith.index_cast %116 : i32 to index
    %c0_86 = arith.constant 0 : index
    %118 = vector.load %arg8[%117, %c0_86] : memref<64x128xf32, #tpu.memory_space<vmem>>, vector<8x128xf32>
    %cst_87 = arith.constant dense<0.000000e+00> : vector<8x128xf32>
    %119 = tpu.matmul %111, %0, %cst_87 {dimension_numbers = #tpu.dot_dimension_numbers<[1], [0], [0], [1], [0, 0, 1, 1], [], []>} : vector<8x32xf32>, vector<32x128xf32>, vector<8x128xf32> -> vector<8x128xf32>
    %120 = arith.addf %118, %119 : vector<8x128xf32>
    %121 = arith.negf %120 : vector<8x128xf32>
    %122 = math.exp %121 : vector<8x128xf32>
    %cst_88 = arith.constant 1.000000e+00 : f32
    %123 = vector.broadcast %cst_88 : f32 to vector<8x128xf32>
    %124 = arith.addf %123, %122 : vector<8x128xf32>
    %125 = arith.divf %123, %124 : vector<8x128xf32>
    %126 = math.tanh %120 : vector<8x128xf32>
    %127 = vector.extract_strided_slice %125 {offsets = [0, 0], sizes = [8, 32], strides = [1, 1]} : vector<8x128xf32> to vector<8x32xf32>
    %128 = vector.extract_strided_slice %125 {offsets = [0, 32], sizes = [8, 32], strides = [1, 1]} : vector<8x128xf32> to vector<8x32xf32>
    %129 = vector.extract_strided_slice %126 {offsets = [0, 64], sizes = [8, 32], strides = [1, 1]} : vector<8x128xf32> to vector<8x32xf32>
    %130 = vector.extract_strided_slice %125 {offsets = [0, 96], sizes = [8, 32], strides = [1, 1]} : vector<8x128xf32> to vector<8x32xf32>
    %131 = arith.mulf %128, %114 : vector<8x32xf32>
    %132 = arith.mulf %127, %129 : vector<8x32xf32>
    %133 = arith.addf %131, %132 : vector<8x32xf32>
    %134 = math.tanh %133 : vector<8x32xf32>
    %135 = arith.mulf %130, %134 : vector<8x32xf32>
    %136 = vector.broadcast %c1_i32 : i32 to vector<8x1xi32>
    %137 = arith.cmpi slt, %136, %1 : vector<8x1xi32>
    %138 = vector.shape_cast %137 : vector<8x1xi1> to vector<8x1xi1>
    %139 = vector.broadcast %138 : vector<8x1xi1> to vector<8x32xi1>
    %140 = arith.select %139, %135, %111 : vector<8x32xi1>, vector<8x32xf32>
    %141 = vector.shape_cast %137 : vector<8x1xi1> to vector<8x1xi1>
    %142 = vector.broadcast %141 : vector<8x1xi1> to vector<8x32xi1>
    %143 = arith.select %142, %133, %114 : vector<8x32xi1>, vector<8x32xf32>
    %c2_i32 = arith.constant 2 : i32
    %c8_i32_89 = arith.constant 8 : i32
    %144 = arith.muli %c2_i32, %c8_i32_89 : i32
    %145 = tpu.assume_multiple %144, 8 : i32
    %146 = arith.index_cast %145 : i32 to index
    %c0_90 = arith.constant 0 : index
    %147 = vector.load %arg8[%146, %c0_90] : memref<64x128xf32, #tpu.memory_space<vmem>>, vector<8x128xf32>
    %cst_91 = arith.constant dense<0.000000e+00> : vector<8x128xf32>
    %148 = tpu.matmul %140, %0, %cst_91 {dimension_numbers = #tpu.dot_dimension_numbers<[1], [0], [0], [1], [0, 0, 1, 1], [], []>} : vector<8x32xf32>, vector<32x128xf32>, vector<8x128xf32> -> vector<8x128xf32>
    %149 = arith.addf %147, %148 : vector<8x128xf32>
    %150 = arith.negf %149 : vector<8x128xf32>
    %151 = math.exp %150 : vector<8x128xf32>
    %cst_92 = arith.constant 1.000000e+00 : f32
    %152 = vector.broadcast %cst_92 : f32 to vector<8x128xf32>
    %153 = arith.addf %152, %151 : vector<8x128xf32>
    %154 = arith.divf %152, %153 : vector<8x128xf32>
    %155 = math.tanh %149 : vector<8x128xf32>
    %156 = vector.extract_strided_slice %154 {offsets = [0, 0], sizes = [8, 32], strides = [1, 1]} : vector<8x128xf32> to vector<8x32xf32>
    %157 = vector.extract_strided_slice %154 {offsets = [0, 32], sizes = [8, 32], strides = [1, 1]} : vector<8x128xf32> to vector<8x32xf32>
    %158 = vector.extract_strided_slice %155 {offsets = [0, 64], sizes = [8, 32], strides = [1, 1]} : vector<8x128xf32> to vector<8x32xf32>
    %159 = vector.extract_strided_slice %154 {offsets = [0, 96], sizes = [8, 32], strides = [1, 1]} : vector<8x128xf32> to vector<8x32xf32>
    %160 = arith.mulf %157, %143 : vector<8x32xf32>
    %161 = arith.mulf %156, %158 : vector<8x32xf32>
    %162 = arith.addf %160, %161 : vector<8x32xf32>
    %163 = math.tanh %162 : vector<8x32xf32>
    %164 = arith.mulf %159, %163 : vector<8x32xf32>
    %165 = vector.broadcast %c2_i32 : i32 to vector<8x1xi32>
    %166 = arith.cmpi slt, %165, %1 : vector<8x1xi32>
    %167 = vector.shape_cast %166 : vector<8x1xi1> to vector<8x1xi1>
    %168 = vector.broadcast %167 : vector<8x1xi1> to vector<8x32xi1>
    %169 = arith.select %168, %164, %140 : vector<8x32xi1>, vector<8x32xf32>
    %170 = vector.shape_cast %166 : vector<8x1xi1> to vector<8x1xi1>
    %171 = vector.broadcast %170 : vector<8x1xi1> to vector<8x32xi1>
    %172 = arith.select %171, %162, %143 : vector<8x32xi1>, vector<8x32xf32>
    %c3_i32 = arith.constant 3 : i32
    %c8_i32_93 = arith.constant 8 : i32
    %173 = arith.muli %c3_i32, %c8_i32_93 : i32
    %174 = tpu.assume_multiple %173, 8 : i32
    %175 = arith.index_cast %174 : i32 to index
    %c0_94 = arith.constant 0 : index
    %176 = vector.load %arg8[%175, %c0_94] : memref<64x128xf32, #tpu.memory_space<vmem>>, vector<8x128xf32>
    %cst_95 = arith.constant dense<0.000000e+00> : vector<8x128xf32>
    %177 = tpu.matmul %169, %0, %cst_95 {dimension_numbers = #tpu.dot_dimension_numbers<[1], [0], [0], [1], [0, 0, 1, 1], [], []>} : vector<8x32xf32>, vector<32x128xf32>, vector<8x128xf32> -> vector<8x128xf32>
    %178 = arith.addf %176, %177 : vector<8x128xf32>
    %179 = arith.negf %178 : vector<8x128xf32>
    %180 = math.exp %179 : vector<8x128xf32>
    %cst_96 = arith.constant 1.000000e+00 : f32
    %181 = vector.broadcast %cst_96 : f32 to vector<8x128xf32>
    %182 = arith.addf %181, %180 : vector<8x128xf32>
    %183 = arith.divf %181, %182 : vector<8x128xf32>
    %184 = math.tanh %178 : vector<8x128xf32>
    %185 = vector.extract_strided_slice %183 {offsets = [0, 0], sizes = [8, 32], strides = [1, 1]} : vector<8x128xf32> to vector<8x32xf32>
    %186 = vector.extract_strided_slice %183 {offsets = [0, 32], sizes = [8, 32], strides = [1, 1]} : vector<8x128xf32> to vector<8x32xf32>
    %187 = vector.extract_strided_slice %184 {offsets = [0, 64], sizes = [8, 32], strides = [1, 1]} : vector<8x128xf32> to vector<8x32xf32>
    %188 = vector.extract_strided_slice %183 {offsets = [0, 96], sizes = [8, 32], strides = [1, 1]} : vector<8x128xf32> to vector<8x32xf32>
    %189 = arith.mulf %186, %172 : vector<8x32xf32>
    %190 = arith.mulf %185, %187 : vector<8x32xf32>
    %191 = arith.addf %189, %190 : vector<8x32xf32>
    %192 = math.tanh %191 : vector<8x32xf32>
    %193 = arith.mulf %188, %192 : vector<8x32xf32>
    %194 = vector.broadcast %c3_i32 : i32 to vector<8x1xi32>
    %195 = arith.cmpi slt, %194, %1 : vector<8x1xi32>
    %196 = vector.shape_cast %195 : vector<8x1xi1> to vector<8x1xi1>
    %197 = vector.broadcast %196 : vector<8x1xi1> to vector<8x32xi1>
    %198 = arith.select %197, %193, %169 : vector<8x32xi1>, vector<8x32xf32>
    %199 = vector.shape_cast %195 : vector<8x1xi1> to vector<8x1xi1>
    %200 = vector.broadcast %199 : vector<8x1xi1> to vector<8x32xi1>
    %201 = arith.select %200, %191, %172 : vector<8x32xi1>, vector<8x32xf32>
    %c4_i32 = arith.constant 4 : i32
    %c8_i32_97 = arith.constant 8 : i32
    %202 = arith.muli %c4_i32, %c8_i32_97 : i32
    %203 = tpu.assume_multiple %202, 8 : i32
    %204 = arith.index_cast %203 : i32 to index
    %c0_98 = arith.constant 0 : index
    %205 = vector.load %arg8[%204, %c0_98] : memref<64x128xf32, #tpu.memory_space<vmem>>, vector<8x128xf32>
    %cst_99 = arith.constant dense<0.000000e+00> : vector<8x128xf32>
    %206 = tpu.matmul %198, %0, %cst_99 {dimension_numbers = #tpu.dot_dimension_numbers<[1], [0], [0], [1], [0, 0, 1, 1], [], []>} : vector<8x32xf32>, vector<32x128xf32>, vector<8x128xf32> -> vector<8x128xf32>
    %207 = arith.addf %205, %206 : vector<8x128xf32>
    %208 = arith.negf %207 : vector<8x128xf32>
    %209 = math.exp %208 : vector<8x128xf32>
    %cst_100 = arith.constant 1.000000e+00 : f32
    %210 = vector.broadcast %cst_100 : f32 to vector<8x128xf32>
    %211 = arith.addf %210, %209 : vector<8x128xf32>
    %212 = arith.divf %210, %211 : vector<8x128xf32>
    %213 = math.tanh %207 : vector<8x128xf32>
    %214 = vector.extract_strided_slice %212 {offsets = [0, 0], sizes = [8, 32], strides = [1, 1]} : vector<8x128xf32> to vector<8x32xf32>
    %215 = vector.extract_strided_slice %212 {offsets = [0, 32], sizes = [8, 32], strides = [1, 1]} : vector<8x128xf32> to vector<8x32xf32>
    %216 = vector.extract_strided_slice %213 {offsets = [0, 64], sizes = [8, 32], strides = [1, 1]} : vector<8x128xf32> to vector<8x32xf32>
    %217 = vector.extract_strided_slice %212 {offsets = [0, 96], sizes = [8, 32], strides = [1, 1]} : vector<8x128xf32> to vector<8x32xf32>
    %218 = arith.mulf %215, %201 : vector<8x32xf32>
    %219 = arith.mulf %214, %216 : vector<8x32xf32>
    %220 = arith.addf %218, %219 : vector<8x32xf32>
    %221 = math.tanh %220 : vector<8x32xf32>
    %222 = arith.mulf %217, %221 : vector<8x32xf32>
    %223 = vector.broadcast %c4_i32 : i32 to vector<8x1xi32>
    %224 = arith.cmpi slt, %223, %1 : vector<8x1xi32>
    %225 = vector.shape_cast %224 : vector<8x1xi1> to vector<8x1xi1>
    %226 = vector.broadcast %225 : vector<8x1xi1> to vector<8x32xi1>
    %227 = arith.select %226, %222, %198 : vector<8x32xi1>, vector<8x32xf32>
    %228 = vector.shape_cast %224 : vector<8x1xi1> to vector<8x1xi1>
    %229 = vector.broadcast %228 : vector<8x1xi1> to vector<8x32xi1>
    %230 = arith.select %229, %220, %201 : vector<8x32xi1>, vector<8x32xf32>
    %c5_i32 = arith.constant 5 : i32
    %c8_i32_101 = arith.constant 8 : i32
    %231 = arith.muli %c5_i32, %c8_i32_101 : i32
    %232 = tpu.assume_multiple %231, 8 : i32
    %233 = arith.index_cast %232 : i32 to index
    %c0_102 = arith.constant 0 : index
    %234 = vector.load %arg8[%233, %c0_102] : memref<64x128xf32, #tpu.memory_space<vmem>>, vector<8x128xf32>
    %cst_103 = arith.constant dense<0.000000e+00> : vector<8x128xf32>
    %235 = tpu.matmul %227, %0, %cst_103 {dimension_numbers = #tpu.dot_dimension_numbers<[1], [0], [0], [1], [0, 0, 1, 1], [], []>} : vector<8x32xf32>, vector<32x128xf32>, vector<8x128xf32> -> vector<8x128xf32>
    %236 = arith.addf %234, %235 : vector<8x128xf32>
    %237 = arith.negf %236 : vector<8x128xf32>
    %238 = math.exp %237 : vector<8x128xf32>
    %cst_104 = arith.constant 1.000000e+00 : f32
    %239 = vector.broadcast %cst_104 : f32 to vector<8x128xf32>
    %240 = arith.addf %239, %238 : vector<8x128xf32>
    %241 = arith.divf %239, %240 : vector<8x128xf32>
    %242 = math.tanh %236 : vector<8x128xf32>
    %243 = vector.extract_strided_slice %241 {offsets = [0, 0], sizes = [8, 32], strides = [1, 1]} : vector<8x128xf32> to vector<8x32xf32>
    %244 = vector.extract_strided_slice %241 {offsets = [0, 32], sizes = [8, 32], strides = [1, 1]} : vector<8x128xf32> to vector<8x32xf32>
    %245 = vector.extract_strided_slice %242 {offsets = [0, 64], sizes = [8, 32], strides = [1, 1]} : vector<8x128xf32> to vector<8x32xf32>
    %246 = vector.extract_strided_slice %241 {offsets = [0, 96], sizes = [8, 32], strides = [1, 1]} : vector<8x128xf32> to vector<8x32xf32>
    %247 = arith.mulf %244, %230 : vector<8x32xf32>
    %248 = arith.mulf %243, %245 : vector<8x32xf32>
    %249 = arith.addf %247, %248 : vector<8x32xf32>
    %250 = math.tanh %249 : vector<8x32xf32>
    %251 = arith.mulf %246, %250 : vector<8x32xf32>
    %252 = vector.broadcast %c5_i32 : i32 to vector<8x1xi32>
    %253 = arith.cmpi slt, %252, %1 : vector<8x1xi32>
    %254 = vector.shape_cast %253 : vector<8x1xi1> to vector<8x1xi1>
    %255 = vector.broadcast %254 : vector<8x1xi1> to vector<8x32xi1>
    %256 = arith.select %255, %251, %227 : vector<8x32xi1>, vector<8x32xf32>
    %257 = vector.shape_cast %253 : vector<8x1xi1> to vector<8x1xi1>
    %258 = vector.broadcast %257 : vector<8x1xi1> to vector<8x32xi1>
    %259 = arith.select %258, %249, %230 : vector<8x32xi1>, vector<8x32xf32>
    %c6_i32 = arith.constant 6 : i32
    %c8_i32_105 = arith.constant 8 : i32
    %260 = arith.muli %c6_i32, %c8_i32_105 : i32
    %261 = tpu.assume_multiple %260, 8 : i32
    %262 = arith.index_cast %261 : i32 to index
    %c0_106 = arith.constant 0 : index
    %263 = vector.load %arg8[%262, %c0_106] : memref<64x128xf32, #tpu.memory_space<vmem>>, vector<8x128xf32>
    %cst_107 = arith.constant dense<0.000000e+00> : vector<8x128xf32>
    %264 = tpu.matmul %256, %0, %cst_107 {dimension_numbers = #tpu.dot_dimension_numbers<[1], [0], [0], [1], [0, 0, 1, 1], [], []>} : vector<8x32xf32>, vector<32x128xf32>, vector<8x128xf32> -> vector<8x128xf32>
    %265 = arith.addf %263, %264 : vector<8x128xf32>
    %266 = arith.negf %265 : vector<8x128xf32>
    %267 = math.exp %266 : vector<8x128xf32>
    %cst_108 = arith.constant 1.000000e+00 : f32
    %268 = vector.broadcast %cst_108 : f32 to vector<8x128xf32>
    %269 = arith.addf %268, %267 : vector<8x128xf32>
    %270 = arith.divf %268, %269 : vector<8x128xf32>
    %271 = math.tanh %265 : vector<8x128xf32>
    %272 = vector.extract_strided_slice %270 {offsets = [0, 0], sizes = [8, 32], strides = [1, 1]} : vector<8x128xf32> to vector<8x32xf32>
    %273 = vector.extract_strided_slice %270 {offsets = [0, 32], sizes = [8, 32], strides = [1, 1]} : vector<8x128xf32> to vector<8x32xf32>
    %274 = vector.extract_strided_slice %271 {offsets = [0, 64], sizes = [8, 32], strides = [1, 1]} : vector<8x128xf32> to vector<8x32xf32>
    %275 = vector.extract_strided_slice %270 {offsets = [0, 96], sizes = [8, 32], strides = [1, 1]} : vector<8x128xf32> to vector<8x32xf32>
    %276 = arith.mulf %273, %259 : vector<8x32xf32>
    %277 = arith.mulf %272, %274 : vector<8x32xf32>
    %278 = arith.addf %276, %277 : vector<8x32xf32>
    %279 = math.tanh %278 : vector<8x32xf32>
    %280 = arith.mulf %275, %279 : vector<8x32xf32>
    %281 = vector.broadcast %c6_i32 : i32 to vector<8x1xi32>
    %282 = arith.cmpi slt, %281, %1 : vector<8x1xi32>
    %283 = vector.shape_cast %282 : vector<8x1xi1> to vector<8x1xi1>
    %284 = vector.broadcast %283 : vector<8x1xi1> to vector<8x32xi1>
    %285 = arith.select %284, %280, %256 : vector<8x32xi1>, vector<8x32xf32>
    %286 = vector.shape_cast %282 : vector<8x1xi1> to vector<8x1xi1>
    %287 = vector.broadcast %286 : vector<8x1xi1> to vector<8x32xi1>
    %288 = arith.select %287, %278, %259 : vector<8x32xi1>, vector<8x32xf32>
    %c7_i32 = arith.constant 7 : i32
    %c8_i32_109 = arith.constant 8 : i32
    %289 = arith.muli %c7_i32, %c8_i32_109 : i32
    %290 = tpu.assume_multiple %289, 8 : i32
    %291 = arith.index_cast %290 : i32 to index
    %c0_110 = arith.constant 0 : index
    %292 = vector.load %arg8[%291, %c0_110] : memref<64x128xf32, #tpu.memory_space<vmem>>, vector<8x128xf32>
    %cst_111 = arith.constant dense<0.000000e+00> : vector<8x128xf32>
    %293 = tpu.matmul %285, %0, %cst_111 {dimension_numbers = #tpu.dot_dimension_numbers<[1], [0], [0], [1], [0, 0, 1, 1], [], []>} : vector<8x32xf32>, vector<32x128xf32>, vector<8x128xf32> -> vector<8x128xf32>
    %294 = arith.addf %292, %293 : vector<8x128xf32>
    %295 = arith.negf %294 : vector<8x128xf32>
    %296 = math.exp %295 : vector<8x128xf32>
    %cst_112 = arith.constant 1.000000e+00 : f32
    %297 = vector.broadcast %cst_112 : f32 to vector<8x128xf32>
    %298 = arith.addf %297, %296 : vector<8x128xf32>
    %299 = arith.divf %297, %298 : vector<8x128xf32>
    %300 = math.tanh %294 : vector<8x128xf32>
    %301 = vector.extract_strided_slice %299 {offsets = [0, 0], sizes = [8, 32], strides = [1, 1]} : vector<8x128xf32> to vector<8x32xf32>
    %302 = vector.extract_strided_slice %299 {offsets = [0, 32], sizes = [8, 32], strides = [1, 1]} : vector<8x128xf32> to vector<8x32xf32>
    %303 = vector.extract_strided_slice %300 {offsets = [0, 64], sizes = [8, 32], strides = [1, 1]} : vector<8x128xf32> to vector<8x32xf32>
    %304 = vector.extract_strided_slice %299 {offsets = [0, 96], sizes = [8, 32], strides = [1, 1]} : vector<8x128xf32> to vector<8x32xf32>
    %305 = arith.mulf %302, %288 : vector<8x32xf32>
    %306 = arith.mulf %301, %303 : vector<8x32xf32>
    %307 = arith.addf %305, %306 : vector<8x32xf32>
    %308 = math.tanh %307 : vector<8x32xf32>
    %309 = arith.mulf %304, %308 : vector<8x32xf32>
    %310 = vector.broadcast %c7_i32 : i32 to vector<8x1xi32>
    %311 = arith.cmpi slt, %310, %1 : vector<8x1xi32>
    %312 = vector.shape_cast %311 : vector<8x1xi1> to vector<8x1xi1>
    %313 = vector.broadcast %312 : vector<8x1xi1> to vector<8x32xi1>
    %314 = arith.select %313, %309, %285 : vector<8x32xi1>, vector<8x32xf32>
    %315 = vector.shape_cast %311 : vector<8x1xi1> to vector<8x1xi1>
    %316 = vector.broadcast %315 : vector<8x1xi1> to vector<8x32xi1>
    %317 = arith.select %316, %307, %288 : vector<8x32xi1>, vector<8x32xf32>
    %c8_i32_113 = arith.constant 8 : i32
    %c0_114 = arith.constant 0 : index
    %c0_115 = arith.constant 0 : index
    %318 = vector.load %arg5[%c0_114, %c0_115] : memref<32x128xf32, #tpu.memory_space<vmem>>, vector<32x128xf32>
    %cst_116 = arith.constant dense<0.000000e+00> : vector<8x128xf32>
    %319 = tpu.matmul %314, %318, %cst_116 {dimension_numbers = #tpu.dot_dimension_numbers<[1], [0], [0], [1], [0, 0, 1, 1], [], []>} : vector<8x32xf32>, vector<32x128xf32>, vector<8x128xf32> -> vector<8x128xf32>
    %c0_117 = arith.constant 0 : index
    %c0_118 = arith.constant 0 : index
    %320 = vector.load %arg6[%c0_117, %c0_118] : memref<1x128xf32, #tpu.memory_space<vmem>>, vector<1x128xf32>
    %321 = vector.broadcast %320 : vector<1x128xf32> to vector<8x128xf32>
    %322 = arith.addf %319, %321 : vector<8x128xf32>
    %cst_119 = arith.constant dense<0xFF800000> : vector<8xf32>
    %323 = vector.multi_reduction <maximumf>, %322, %cst_119 [1] : vector<8x128xf32> to vector<8xf32>
    %324 = vector.shape_cast %323 : vector<8xf32> to vector<8x1xf32>
    %325 = vector.broadcast %324 : vector<8x1xf32> to vector<8x128xf32>
    %326 = arith.subf %322, %325 : vector<8x128xf32>
    %327 = math.exp %326 : vector<8x128xf32>
    %cst_120 = arith.constant dense<0.000000e+00> : vector<8xf32>
    %328 = vector.multi_reduction <add>, %327, %cst_120 [1] : vector<8x128xf32> to vector<8xf32>
    %329 = vector.shape_cast %328 : vector<8xf32> to vector<8x1xf32>
    %330 = math.log %329 : vector<8x1xf32>
    %331 = vector.broadcast %330 : vector<8x1xf32> to vector<8x128xf32>
    %332 = arith.subf %326, %331 : vector<8x128xf32>
    %c0_121 = arith.constant 0 : index
    %c0_122 = arith.constant 0 : index
    %333 = vector.load %arg7[%c0_121, %c0_122] : memref<8x128xf32, #tpu.memory_space<vmem>>, vector<8x128xf32>
    tpu.vector_store %arg7[%c0_121, %c0_122], %332 {strides = array<i32>} : memref<8x128xf32, #tpu.memory_space<vmem>>, vector<8x128xf32>,
    return
  }
  func.func @transform_0(%arg0: i32, %arg1: memref<2x8xi32, #tpu.memory_space<smem>>) -> (i32, i32) {
    %c0_i32 = arith.constant 0 : i32
    %c0_i32_0 = arith.constant 0 : i32
    %c0_i32_1 = arith.constant 0 : i32
    return %c0_i32, %c0_i32_0 : i32, i32
  }
  func.func @transform_1(%arg0: i32, %arg1: memref<2x8xi32, #tpu.memory_space<smem>>) -> (i32, i32, i32) {
    %c0_i32 = arith.constant 0 : i32
    %c0_i32_0 = arith.constant 0 : i32
    %c0_i32_1 = arith.constant 0 : i32
    %c0_i32_2 = arith.constant 0 : i32
    return %c0_i32, %c0_i32_0, %c0_i32_1 : i32, i32, i32
  }
  func.func @transform_2(%arg0: i32, %arg1: memref<2x8xi32, #tpu.memory_space<smem>>) -> (i32, i32) {
    %c0_i32 = arith.constant 0 : i32
    %c0_i32_0 = arith.constant 0 : i32
    %c0_i32_1 = arith.constant 0 : i32
    return %c0_i32, %c0_i32_0 : i32, i32
  }
  func.func @transform_3(%arg0: i32, %arg1: memref<2x8xi32, #tpu.memory_space<smem>>) -> (i32, i32) {
    %c0_i32 = arith.constant 0 : i32
    %c0_i32_0 = arith.constant 0 : i32
    %c0_i32_1 = arith.constant 0 : i32
    return %c0_i32, %c0_i32_0 : i32, i32
  }
  func.func @transform_4(%arg0: i32, %arg1: memref<2x8xi32, #tpu.memory_space<smem>>) -> (i32, i32) {
    %c0_i32 = arith.constant 0 : i32
    %c0_i32_0 = arith.constant 0 : i32
    %c0_i32_1 = arith.constant 0 : i32
    return %c0_i32, %c0_i32_0 : i32, i32
  }
  func.func @transform_5(%arg0: i32, %arg1: memref<2x8xi32, #tpu.memory_space<smem>>) -> (i32, i32) {
    %c0_i32 = arith.constant 0 : i32
    %c0_i32_0 = arith.constant 0 : i32
    %c0_i32_1 = arith.constant 0 : i32
    return %c0_i32, %c0_i32_0 : i32, i32
  }
}

</mosaic_0001>

<llo_original>
// kernel: lstm_forward.1
$region0: #{lstm_forward.1}
  #allocation0 [shape = 'u32[]', space=smem, size = 0x4, offset = 0x4, fixed_abs, tag = 'smem constant byte address 0x4 - core index']
  #allocation1 [shape = 'u32[144,128]{1,0:T(1,128)}', space=vmem, size = 0x12000, scoped, tag = 'internal scratch']
  #allocation2 [shape = 'f32[64,128]{1,0:T(8,128)}', space=vmem, size = 0x8000, scoped, tag = 'scratch operand']
  #allocation3 [shape = 's32[1]{0}', space=sflag, size = 0x4, scoped, tag = 'scoped memory for lstm_forward.1']
  #allocation4 [shape = 'u8[1024]{0}', space=smem, size = 0x400, scoped, tag = 'prefetched SMEM operand 0']
  %s0 = inlined_call_operand.hbm [shape: s32[2,8], index: 0, kind: input, shape index: {}]
  %s1 = inlined_call_operand.vmem [shape: s32[8,1], index: 1, kind: input, shape index: {}]
  %s2 = inlined_call_operand.hbm [shape: f32[100,1,128], index: 2, kind: input, shape index: {}]
  %s3 = inlined_call_operand.hbm [shape: f32[32,128], index: 3, kind: input, shape index: {}]
  %s4 = inlined_call_operand.vmem [shape: f32[32,128], index: 4, kind: input, shape index: {}]
  %s5 = inlined_call_operand.vmem [shape: f32[1,128], index: 5, kind: input, shape index: {}]
  %s6 = inlined_call_operand.vmem [shape: f32[8,128], index: 6, kind: output, shape index: {}]
  %s7 = sld [smem:[#allocation0]]
  $region38: #{lstm_forward.1} parent=0
    _
  %s9 = ssub.s32 1, %s7
  %s10 = scalar_select 0, %s9, %s7
  %12 = dma.hbm_to_smem %s0, 32, [#allocation4], [#allocation3]
  %13 = dma.done [#allocation3], 32
  %14 = sfence
  $region1: #{lstm_forward.1} parent=0
    #allocation5 [shape = 'u8[51200]{0}', space=vmem, size = 0xc800, scoped, tag = 'input window, operand 2, single buffered']
    #allocation6 [shape = 's32[1]{0}', space=sflag, size = 0x4, scoped, tag = 'scoped memory for lstm_forward.1']
    #allocation7 [shape = 'u8[16384]{0}', space=vmem, size = 0x4000, scoped, tag = 'input window, operand 3, single buffered']
    #allocation8 [shape = 's32[1]{0}', space=sflag, size = 0x4, scoped, tag = 'scoped memory for lstm_forward.1']
    %15 = vsyncpa [#allocation6], 0
    %16 = vsyncpa [#allocation8], 0
    // Predicated region
    $region2: #{lstm_forward.1} parent=1 // pred_check
      _
    $region3: #{lstm_forward.1} parent=1 // pred_check_branch
      %18 = sbr.rel (0) target = $region5
    $region4: #{lstm_forward.1} parent=1 // pred_region
      _
    $region5: #{lstm_forward.1} parent=1 // pred_fallthru
      _
    // Predicated region
    $region6: #{lstm_forward.1} parent=1 // pred_check
      _
    $region7: #{lstm_forward.1} parent=1 // pred_check_branch
      %20 = sbr.rel (0) target = $region9
    $region8: #{lstm_forward.1} parent=1 // pred_region
      %s22 = ssub.s32 1600, 1600
      %23 = vsyncadd [#allocation6], %s22
      %s24 = sshll.u32 [#allocation5], 4
      %s25 = int_to_ptr.vmem [resolvable:$true] %s24
      %30 = dma.hbm_to_vmem [thread:$0]  %s2, 1600, %s25, [#allocation6], 16, 16, 1
    $region9: #{lstm_forward.1} parent=1 // pred_fallthru
      _
    // Predicated region
    $region10: #{lstm_forward.1} parent=1 // pred_check
      _
    $region11: #{lstm_forward.1} parent=1 // pred_check_branch
      %32 = sbr.rel (0) target = $region13
    $region12: #{lstm_forward.1} parent=1 // pred_region
      %s34 = ssub.s32 512, 512
      %35 = vsyncadd [#allocation8], %s34
      %s36 = sshll.u32 [#allocation7], 4
      %s37 = int_to_ptr.vmem [resolvable:$true] %s36
      %42 = dma.hbm_to_vmem [thread:$0]  %s3, 512, %s37, [#allocation8], 128, 128, 8
    $region13: #{lstm_forward.1} parent=1 // pred_fallthru
      _
    // Predicated region
    $region14: #{lstm_forward.1} parent=1 // pred_check
      _
    $region15: #{lstm_forward.1} parent=1 // pred_check_branch
      %44 = sbr.rel (0) target = $region17
    $region16: #{lstm_forward.1} parent=1 // pred_region
      _
    $region17: #{lstm_forward.1} parent=1 // pred_fallthru
      _
    // Predicated region
    $region18: #{lstm_forward.1} parent=1 // pred_check
      _
    $region19: #{lstm_forward.1} parent=1 // pred_check_branch
      %46 = sbr.rel (0) target = $region21
    $region20: #{lstm_forward.1} parent=1 // pred_region
      _
    $region21: #{lstm_forward.1} parent=1 // pred_fallthru
      _
    // Predicated region
    $region22: #{lstm_forward.1} parent=1 // pred_check
      _
    $region23: #{lstm_forward.1} parent=1 // pred_check_branch
      %48 = sbr.rel (0) target = $region25
    $region24: #{lstm_forward.1} parent=1 // pred_region
      %49 = dma.done [#allocation6], 1600
    $region25: #{lstm_forward.1} parent=1 // pred_fallthru
      _
    // Predicated region
    $region26: #{lstm_forward.1} parent=1 // pred_check
      _
    $region27: #{lstm_forward.1} parent=1 // pred_check_branch
      %51 = sbr.rel (0) target = $region29
    $region28: #{lstm_forward.1} parent=1 // pred_region
      %52 = dma.done [#allocation8], 512
    $region29: #{lstm_forward.1} parent=1 // pred_fallthru
      _
    %v53 = vld [vmem:[#allocation7] sm:$0xff]
    %v54 = vld [vmem:[#allocation7 + $0x8] sm:$0xff]
    %v55 = vld [vmem:[#allocation7 + $0x10] sm:$0xff]
    %v56 = vld [vmem:[#allocation7 + $0x18] sm:$0xff]
    %v57 = vld [vmem:[%s1] sm:$0xff]
    %58 = vst [vmem:[#allocation2] sm:$0xff] 0.0
    %59 = vst [vmem:[#allocation2 + $0x8] sm:$0xff] 0.0
    %60 = vst [vmem:[#allocation2 + $0x10] sm:$0xff] 0.0
    %61 = vst [vmem:[#allocation2 + $0x18] sm:$0xff] 0.0
    %62 = vst [vmem:[#allocation2 + $0x20] sm:$0xff] 0.0
    %63 = vst [vmem:[#allocation2 + $0x28] sm:$0xff] 0.0
    %64 = vst [vmem:[#allocation2 + $0x30] sm:$0xff] 0.0
    %65 = vst [vmem:[#allocation2 + $0x38] sm:$0xff] 0.0
    %s66 = sld [smem:[#allocation4]]
    %s67 = scalar_lea.vmem [#allocation5], %s66
    %v68 = vld [vmem:[%s67] sm:$0x1]
    %69 = vst [vmem:[#allocation2] sm:$0x1] %v68
    %s70 = sld [smem:[#allocation4 + $0x80]]
    %s71 = scalar_lea.vmem [#allocation5], %s70
    %v72 = vld [vmem:[%s71] sm:$0x1]
    %73 = vst [vmem:[#allocation2 + $0x1] sm:$0x1] %v72
    %s74 = sld [smem:[#allocation4 + $0x1]]
    %s75 = scalar_lea.vmem [#allocation5], %s74
    %v76 = vld [vmem:[%s75] sm:$0x1]
    %77 = vst [vmem:[#allocation2 + $0x8] sm:$0x1] %v76
    %s78 = sld [smem:[#allocation4 + $0x81]]
    %s79 = scalar_lea.vmem [#allocation5], %s78
    %v80 = vld [vmem:[%s79] sm:$0x1]
    %81 = vst [vmem:[#allocation2 + $0x9] sm:$0x1] %v80
    %s82 = sld [smem:[#allocation4 + $0x2]]
    %s83 = scalar_lea.vmem [#allocation5], %s82
    %v84 = vld [vmem:[%s83] sm:$0x1]
    %85 = vst [vmem:[#allocation2 + $0x10] sm:$0x1] %v84
    %s86 = sld [smem:[#allocation4 + $0x82]]
    %s87 = scalar_lea.vmem [#allocation5], %s86
    %v88 = vld [vmem:[%s87] sm:$0x1]
    %89 = vst [vmem:[#allocation2 + $0x11] sm:$0x1] %v88
    %s90 = sld [smem:[#allocation4 + $0x3]]
    %s91 = scalar_lea.vmem [#allocation5], %s90
    %v92 = vld [vmem:[%s91] sm:$0x1]
    %93 = vst [vmem:[#allocation2 + $0x18] sm:$0x1] %v92
    %s94 = sld [smem:[#allocation4 + $0x83]]
    %s95 = scalar_lea.vmem [#allocation5], %s94
    %v96 = vld [vmem:[%s95] sm:$0x1]
    %97 = vst [vmem:[#allocation2 + $0x19] sm:$0x1] %v96
    %s98 = sld [smem:[#allocation4 + $0x4]]
    %s99 = scalar_lea.vmem [#allocation5], %s98
    %v100 = vld [vmem:[%s99] sm:$0x1]
    %101 = vst [vmem:[#allocation2 + $0x20] sm:$0x1] %v100
    %s102 = sld [smem:[#allocation4 + $0x84]]
    %s103 = scalar_lea.vmem [#allocation5], %s102
    %v104 = vld [vmem:[%s103] sm:$0x1]
    %105 = vst [vmem:[#allocation2 + $0x21] sm:$0x1] %v104
    %s106 = sld [smem:[#allocation4 + $0x5]]
    %s107 = scalar_lea.vmem [#allocation5], %s106
    %v108 = vld [vmem:[%s107] sm:$0x1]
    %109 = vst [vmem:[#allocation2 + $0x28] sm:$0x1] %v108
    %s110 = sld [smem:[#allocation4 + $0x85]]
    %s111 = scalar_lea.vmem [#allocation5], %s110
    %v112 = vld [vmem:[%s111] sm:$0x1]
    %113 = vst [vmem:[#allocation2 + $0x29] sm:$0x1] %v112
    %s114 = sld [smem:[#allocation4 + $0x6]]
    %s115 = scalar_lea.vmem [#allocation5], %s114
    %v116 = vld [vmem:[%s115] sm:$0x1]
    %117 = vst [vmem:[#allocation2 + $0x30] sm:$0x1] %v116
    %s118 = sld [smem:[#allocation4 + $0x86]]
    %s119 = scalar_lea.vmem [#allocation5], %s118
    %v120 = vld [vmem:[%s119] sm:$0x1]
    %121 = vst [vmem:[#allocation2 + $0x31] sm:$0x1] %v120
    %s122 = sld [smem:[#allocation4 + $0x7]]
    %s123 = scalar_lea.vmem [#allocation5], %s122
    %v124 = vld [vmem:[%s123] sm:$0x1]
    %125 = vst [vmem:[#allocation2 + $0x38] sm:$0x1] %v124
    %s126 = sld [smem:[#allocation4 + $0x87]]
    %s127 = scalar_lea.vmem [#allocation5], %s126
    %v128 = vld [vmem:[%s127] sm:$0x1]
    %129 = vst [vmem:[#allocation2 + $0x39] sm:$0x1] %v128
    %v130 = vld [vmem:[#allocation2] sm:$0xff]
    %vm131 = vcmask 261120
    %v133 = vsel %vm131, 0.0, 0
    %135 = vmatprep.subr.mxu0 0.0
    %136 = vmatpush1.msra.mxu0 %v53
    %137 = vmatprep.subr.mxu0 0.0
    %138 = vmatpush1.msra.mxu0 %v54
    %139 = vmatprep.subr.mxu0 0.0
    %140 = vmatpush1.msra.mxu0 %v55
    %141 = vmatprep.subr.mxu0 0.0
    %142 = vmatpush1.msra.mxu0 %v56
    %143 = vmatprep.subr.mxu0 0.0
    %144 = vmatpush1.msra.mxu0 0.0
    %145 = vmatprep.subr.mxu0 0.0
    %146 = vmatpush1.msra.mxu0 0.0
    %147 = vmatprep.subr.mxu0 0.0
    %148 = vmatpush1.msra.mxu0 0.0
    %149 = vmatprep.subr.mxu0 0.0
    %150 = vmatpush1.msra.mxu0 0.0
    %151 = vmatprep.subr.mxu0 0.0
    %152 = vmatpush1.msra.mxu0 0.0
    %153 = vmatprep.subr.mxu0 0.0
    %154 = vmatpush1.msra.mxu0 0.0
    %155 = vmatprep.subr.mxu0 0.0
    %156 = vmatpush1.msra.mxu0 0.0
    %157 = vmatprep.subr.mxu0 0.0
    %158 = vmatpush1.msra.mxu0 0.0
    %159 = vmatprep.subr.mxu0 0.0
    %160 = vmatpush1.msra.mxu0 0.0
    %161 = vmatprep.subr.mxu0 0.0
    %162 = vmatpush1.msra.mxu0 0.0
    %163 = vmatprep.subr.mxu0 0.0
    %164 = vmatpush1.msra.mxu0 0.0
    %165 = vmatprep.subr.mxu0 0.0
    %166 = vmatpush1.msra.mxu0 0.0
    %167 = vmatprep.subr.mxu0 0.0
    %168 = vmatpush1.msra.mxu0 0.0
    %169 = vmatprep.subr.mxu0 0.0
    %170 = vmatpush1.msra.mxu0 0.0
    %171 = vmatprep.subr.mxu0 0.0
    %172 = vmatpush1.msra.mxu0 0.0
    %173 = vmatprep.subr.mxu0 0.0
    %174 = vmatpush1.msra.mxu0 0.0
    %175 = vmatprep.subr.mxu0 0.0
    %176 = vmatpush1.msra.mxu0 0.0
    %177 = vmatprep.subr.mxu0 0.0
    %178 = vmatpush1.msra.mxu0 0.0
    %179 = vmatprep.subr.mxu0 0.0
    %180 = vmatpush1.msra.mxu0 0.0
    %181 = vmatprep.subr.mxu0 0.0
    %182 = vmatpush1.msra.mxu0 0.0
    %183 = vmatprep.subr.mxu0 0.0
    %184 = vmatpush1.msra.mxu0 0.0
    %185 = vmatprep.subr.mxu0 0.0
    %186 = vmatpush1.msra.mxu0 0.0
    %187 = vmatprep.subr.mxu0 0.0
    %188 = vmatpush1.msra.mxu0 0.0
    %189 = vmatprep.subr.mxu0 0.0
    %190 = vmatpush1.msra.mxu0 0.0
    %191 = vmatprep.subr.mxu0 0.0
    %192 = vmatpush1.msra.mxu0 0.0
    %193 = vmatprep.subr.mxu0 0.0
    %194 = vmatpush1.msra.mxu0 0.0
    %195 = vmatprep.subr.mxu0 0.0
    %196 = vmatpush1.msra.mxu0 0.0
    %197 = vmatprep.subr.mxu0 0.0
    %198 = vmatpush1.msra.mxu0 0.0
    %199 = vmatprep.mubr.f32.mxu0 0.0
    %200 = vmatmul.mubr.f32.gmra.mrb[0].mxu0 %v133
    %v201 = vpop.f32.mrb[0].mxu0
    %v202 = vadd.f32 0.0, %v201
    %v203 = vpop.f32.mrb[0].mxu0
    %204 = vdwg.mxu0
    %v205 = vadd.f32 %v130, %v202
    %v206 = vxor.u32 %v205, 2147483648
    %v207 = vmul.f32 %v206, 1.442695
    %v208 = vpow.pop %v207
    %v209 = vadd.f32 %v208, 1.0
    %v210 = vrcp.pop %v209
    %v211 = vmul.f32 1.0, %v210
    %v212 = vtanh.pop %v205
    %v213 = vmul.f32 %v211, 0.0
    %215 = vrot.lane.b32.xlu0 %v212, 64
    %v216 = vpop.permute.xlu0 %215
    %v218 = vmul.f32 %v211, %v216
    %220 = vrot.lane.b32.xlu0 %v218, 32
    %v221 = vpop.permute.xlu0 %220
    %v223 = vadd.f32 %v213, %v221
    %v224 = vtanh.pop %v223
    %226 = vrot.lane.b32.xlu0 %v224, 64
    %v227 = vpop.permute.xlu0 %226
    %v229 = vmul.f32 %v211, %v227
    %vm230 = vcmp.gt.s32.totalorder %v57, 0
    %v231 = vsel %vm230, 1, 0
    %232 = vset.pattern.permute.xlu0 0
    %233 = vperm.xlu0 %232, %v231
    %v234 = vpop.permute.xlu0 %233
    %vm235 = vcmp.eq.s32.totalorder %v234, 1
    %v236 = vsel %vm235, %v229, 0.0
    %v237 = vsel %vm235, %v223, 0.0
    %s238 = scalar_lea.vmem [#allocation2], 8
    %v239 = vld [vmem:[%s238] sm:$0xff]
    %241 = vrot.lane.b32.xlu0 %v236, 32
    %v242 = vpop.permute.xlu0 %241
    %v243 = vsel %vm131, %v242, 0
    %245 = vmatprep.subr.mxu0 0.0
    %246 = vmatpush1.msra.mxu0 %v53
    %247 = vmatprep.subr.mxu0 0.0
    %248 = vmatpush1.msra.mxu0 %v54
    %249 = vmatprep.subr.mxu0 0.0
    %250 = vmatpush1.msra.mxu0 %v55
    %251 = vmatprep.subr.mxu0 0.0
    %252 = vmatpush1.msra.mxu0 %v56
    %253 = vmatprep.subr.mxu0 0.0
    %254 = vmatpush1.msra.mxu0 0.0
    %255 = vmatprep.subr.mxu0 0.0
    %256 = vmatpush1.msra.mxu0 0.0
    %257 = vmatprep.subr.mxu0 0.0
    %258 = vmatpush1.msra.mxu0 0.0
    %259 = vmatprep.subr.mxu0 0.0
    %260 = vmatpush1.msra.mxu0 0.0
    %261 = vmatprep.subr.mxu0 0.0
    %262 = vmatpush1.msra.mxu0 0.0
    %263 = vmatprep.subr.mxu0 0.0
    %264 = vmatpush1.msra.mxu0 0.0
    %265 = vmatprep.subr.mxu0 0.0
    %266 = vmatpush1.msra.mxu0 0.0
    %267 = vmatprep.subr.mxu0 0.0
    %268 = vmatpush1.msra.mxu0 0.0
    %269 = vmatprep.subr.mxu0 0.0
    %270 = vmatpush1.msra.mxu0 0.0
    %271 = vmatprep.subr.mxu0 0.0
    %272 = vmatpush1.msra.mxu0 0.0
    %273 = vmatprep.subr.mxu0 0.0
    %274 = vmatpush1.msra.mxu0 0.0
    %275 = vmatprep.subr.mxu0 0.0
    %276 = vmatpush1.msra.mxu0 0.0
    %277 = vmatprep.subr.mxu0 0.0
    %278 = vmatpush1.msra.mxu0 0.0
    %279 = vmatprep.subr.mxu0 0.0
    %280 = vmatpush1.msra.mxu0 0.0
    %281 = vmatprep.subr.mxu0 0.0
    %282 = vmatpush1.msra.mxu0 0.0
    %283 = vmatprep.subr.mxu0 0.0
    %284 = vmatpush1.msra.mxu0 0.0
    %285 = vmatprep.subr.mxu0 0.0
    %286 = vmatpush1.msra.mxu0 0.0
    %287 = vmatprep.subr.mxu0 0.0
    %288 = vmatpush1.msra.mxu0 0.0
    %289 = vmatprep.subr.mxu0 0.0
    %290 = vmatpush1.msra.mxu0 0.0
    %291 = vmatprep.subr.mxu0 0.0
    %292 = vmatpush1.msra.mxu0 0.0
    %293 = vmatprep.subr.mxu0 0.0
    %294 = vmatpush1.msra.mxu0 0.0
    %295 = vmatprep.subr.mxu0 0.0
    %296 = vmatpush1.msra.mxu0 0.0
    %297 = vmatprep.subr.mxu0 0.0
    %298 = vmatpush1.msra.mxu0 0.0
    %299 = vmatprep.subr.mxu0 0.0
    %300 = vmatpush1.msra.mxu0 0.0
    %301 = vmatprep.subr.mxu0 0.0
    %302 = vmatpush1.msra.mxu0 0.0
    %303 = vmatprep.subr.mxu0 0.0
    %304 = vmatpush1.msra.mxu0 0.0
    %305 = vmatprep.subr.mxu0 0.0
    %306 = vmatpush1.msra.mxu0 0.0
    %307 = vmatprep.subr.mxu0 0.0
    %308 = vmatpush1.msra.mxu0 0.0
    %309 = vmatprep.mubr.f32.mxu0 0.0
    %310 = vmatmul.mubr.f32.gmra.mrb[0].mxu0 %v243
    %v311 = vpop.f32.mrb[0].mxu0
    %v312 = vadd.f32 0.0, %v311
    %v313 = vpop.f32.mrb[0].mxu0
    %314 = vdwg.mxu0
    %v315 = vadd.f32 %v239, %v312
    %v316 = vxor.u32 %v315, 2147483648
    %v317 = vmul.f32 %v316, 1.442695
    %v318 = vpow.pop %v317
    %v319 = vadd.f32 %v318, 1.0
    %v320 = vrcp.pop %v319
    %v321 = vmul.f32 1.0, %v320
    %v322 = vtanh.pop %v315
    %v323 = vmul.f32 %v321, %v237
    %325 = vrot.lane.b32.xlu0 %v322, 64
    %v326 = vpop.permute.xlu0 %325
    %v328 = vmul.f32 %v321, %v326
    %330 = vrot.lane.b32.xlu0 %v328, 32
    %v331 = vpop.permute.xlu0 %330
    %v333 = vadd.f32 %v323, %v331
    %v334 = vtanh.pop %v333
    %336 = vrot.lane.b32.xlu0 %v334, 64
    %v337 = vpop.permute.xlu0 %336
    %v339 = vmul.f32 %v321, %v337
    %vm340 = vcmp.gt.s32.totalorder %v57, 1
    %v341 = vsel %vm340, 1, 0
    %342 = vset.pattern.permute.xlu0 0
    %343 = vperm.xlu0 %342, %v341
    %v344 = vpop.permute.xlu0 %343
    %vm345 = vcmp.eq.s32.totalorder %v344, 1
    %v346 = vsel %vm345, %v339, %v236
    %v347 = vsel %vm345, %v333, %v237
    %s348 = scalar_lea.vmem [#allocation2], 16
    %v349 = vld [vmem:[%s348] sm:$0xff]
    %351 = vrot.lane.b32.xlu0 %v346, 32
    %v352 = vpop.permute.xlu0 %351
    %v353 = vsel %vm131, %v352, 0
    %355 = vmatprep.subr.mxu0 0.0
    %356 = vmatpush1.msra.mxu0 %v53
    %357 = vmatprep.subr.mxu0 0.0
    %358 = vmatpush1.msra.mxu0 %v54
    %359 = vmatprep.subr.mxu0 0.0
    %360 = vmatpush1.msra.mxu0 %v55
    %361 = vmatprep.subr.mxu0 0.0
    %362 = vmatpush1.msra.mxu0 %v56
    %363 = vmatprep.subr.mxu0 0.0
    %364 = vmatpush1.msra.mxu0 0.0
    %365 = vmatprep.subr.mxu0 0.0
    %366 = vmatpush1.msra.mxu0 0.0
    %367 = vmatprep.subr.mxu0 0.0
    %368 = vmatpush1.msra.mxu0 0.0
    %369 = vmatprep.subr.mxu0 0.0
    %370 = vmatpush1.msra.mxu0 0.0
    %371 = vmatprep.subr.mxu0 0.0
    %372 = vmatpush1.msra.mxu0 0.0
    %373 = vmatprep.subr.mxu0 0.0
    %374 = vmatpush1.msra.mxu0 0.0
    %375 = vmatprep.subr.mxu0 0.0
    %376 = vmatpush1.msra.mxu0 0.0
    %377 = vmatprep.subr.mxu0 0.0
    %378 = vmatpush1.msra.mxu0 0.0
    %379 = vmatprep.subr.mxu0 0.0
    %380 = vmatpush1.msra.mxu0 0.0
    %381 = vmatprep.subr.mxu0 0.0
    %382 = vmatpush1.msra.mxu0 0.0
    %383 = vmatprep.subr.mxu0 0.0
    %384 = vmatpush1.msra.mxu0 0.0
    %385 = vmatprep.subr.mxu0 0.0
    %386 = vmatpush1.msra.mxu0 0.0
    %387 = vmatprep.subr.mxu0 0.0
    %388 = vmatpush1.msra.mxu0 0.0
    %389 = vmatprep.subr.mxu0 0.0
    %390 = vmatpush1.msra.mxu0 0.0
    %391 = vmatprep.subr.mxu0 0.0
    %392 = vmatpush1.msra.mxu0 0.0
    %393 = vmatprep.subr.mxu0 0.0
    %394 = vmatpush1.msra.mxu0 0.0
    %395 = vmatprep.subr.mxu0 0.0
    %396 = vmatpush1.msra.mxu0 0.0
    %397 = vmatprep.subr.mxu0 0.0
    %398 = vmatpush1.msra.mxu0 0.0
    %399 = vmatprep.subr.mxu0 0.0
    %400 = vmatpush1.msra.mxu0 0.0
    %401 = vmatprep.subr.mxu0 0.0
    %402 = vmatpush1.msra.mxu0 0.0
    %403 = vmatprep.subr.mxu0 0.0
    %404 = vmatpush1.msra.mxu0 0.0
    %405 = vmatprep.subr.mxu0 0.0
    %406 = vmatpush1.msra.mxu0 0.0
    %407 = vmatprep.subr.mxu0 0.0
    %408 = vmatpush1.msra.mxu0 0.0
    %409 = vmatprep.subr.mxu0 0.0
    %410 = vmatpush1.msra.mxu0 0.0
    %411 = vmatprep.subr.mxu0 0.0
    %412 = vmatpush1.msra.mxu0 0.0
    %413 = vmatprep.subr.mxu0 0.0
    %414 = vmatpush1.msra.mxu0 0.0
    %415 = vmatprep.subr.mxu0 0.0
    %416 = vmatpush1.msra.mxu0 0.0
    %417 = vmatprep.subr.mxu0 0.0
    %418 = vmatpush1.msra.mxu0 0.0
    %419 = vmatprep.mubr.f32.mxu0 0.0
    %420 = vmatmul.mubr.f32.gmra.mrb[0].mxu0 %v353
    %v421 = vpop.f32.mrb[0].mxu0
    %v422 = vadd.f32 0.0, %v421
    %v423 = vpop.f32.mrb[0].mxu0
    %424 = vdwg.mxu0
    %v425 = vadd.f32 %v349, %v422
    %v426 = vxor.u32 %v425, 2147483648
    %v427 = vmul.f32 %v426, 1.442695
    %v428 = vpow.pop %v427
    %v429 = vadd.f32 %v428, 1.0
    %v430 = vrcp.pop %v429
    %v431 = vmul.f32 1.0, %v430
    %v432 = vtanh.pop %v425
    %v433 = vmul.f32 %v431, %v347
    %435 = vrot.lane.b32.xlu0 %v432, 64
    %v436 = vpop.permute.xlu0 %435
    %v438 = vmul.f32 %v431, %v436
    %440 = vrot.lane.b32.xlu0 %v438, 32
    %v441 = vpop.permute.xlu0 %440
    %v443 = vadd.f32 %v433, %v441
    %v444 = vtanh.pop %v443
    %446 = vrot.lane.b32.xlu0 %v444, 64
    %v447 = vpop.permute.xlu0 %446
    %v449 = vmul.f32 %v431, %v447
    %vm450 = vcmp.gt.s32.totalorder %v57, 2
    %v451 = vsel %vm450, 1, 0
    %452 = vset.pattern.permute.xlu0 0
    %453 = vperm.xlu0 %452, %v451
    %v454 = vpop.permute.xlu0 %453
    %vm455 = vcmp.eq.s32.totalorder %v454, 1
    %v456 = vsel %vm455, %v449, %v346
    %v457 = vsel %vm455, %v443, %v347
    %s458 = scalar_lea.vmem [#allocation2], 24
    %v459 = vld [vmem:[%s458] sm:$0xff]
    %461 = vrot.lane.b32.xlu0 %v456, 32
    %v462 = vpop.permute.xlu0 %461
    %v463 = vsel %vm131, %v462, 0
    %465 = vmatprep.subr.mxu0 0.0
    %466 = vmatpush1.msra.mxu0 %v53
    %467 = vmatprep.subr.mxu0 0.0
    %468 = vmatpush1.msra.mxu0 %v54
    %469 = vmatprep.subr.mxu0 0.0
    %470 = vmatpush1.msra.mxu0 %v55
    %471 = vmatprep.subr.mxu0 0.0
    %472 = vmatpush1.msra.mxu0 %v56
    %473 = vmatprep.subr.mxu0 0.0
    %474 = vmatpush1.msra.mxu0 0.0
    %475 = vmatprep.subr.mxu0 0.0
    %476 = vmatpush1.msra.mxu0 0.0
    %477 = vmatprep.subr.mxu0 0.0
    %478 = vmatpush1.msra.mxu0 0.0
    %479 = vmatprep.subr.mxu0 0.0
    %480 = vmatpush1.msra.mxu0 0.0
    %481 = vmatprep.subr.mxu0 0.0
    %482 = vmatpush1.msra.mxu0 0.0
    %483 = vmatprep.subr.mxu0 0.0
    %484 = vmatpush1.msra.mxu0 0.0
    %485 = vmatprep.subr.mxu0 0.0
    %486 = vmatpush1.msra.mxu0 0.0
    %487 = vmatprep.subr.mxu0 0.0
    %488 = vmatpush1.msra.mxu0 0.0
    %489 = vmatprep.subr.mxu0 0.0
    %490 = vmatpush1.msra.mxu0 0.0
    %491 = vmatprep.subr.mxu0 0.0
    %492 = vmatpush1.msra.mxu0 0.0
    %493 = vmatprep.subr.mxu0 0.0
    %494 = vmatpush1.msra.mxu0 0.0
    %495 = vmatprep.subr.mxu0 0.0
    %496 = vmatpush1.msra.mxu0 0.0
    %497 = vmatprep.subr.mxu0 0.0
    %498 = vmatpush1.msra.mxu0 0.0
    %499 = vmatprep.subr.mxu0 0.0
    %500 = vmatpush1.msra.mxu0 0.0
    %501 = vmatprep.subr.mxu0 0.0
    %502 = vmatpush1.msra.mxu0 0.0
    %503 = vmatprep.subr.mxu0 0.0
    %504 = vmatpush1.msra.mxu0 0.0
    %505 = vmatprep.subr.mxu0 0.0
    %506 = vmatpush1.msra.mxu0 0.0
    %507 = vmatprep.subr.mxu0 0.0
    %508 = vmatpush1.msra.mxu0 0.0
    %509 = vmatprep.subr.mxu0 0.0
    %510 = vmatpush1.msra.mxu0 0.0
    %511 = vmatprep.subr.mxu0 0.0
    %512 = vmatpush1.msra.mxu0 0.0
    %513 = vmatprep.subr.mxu0 0.0
    %514 = vmatpush1.msra.mxu0 0.0
    %515 = vmatprep.subr.mxu0 0.0
    %516 = vmatpush1.msra.mxu0 0.0
    %517 = vmatprep.subr.mxu0 0.0
    %518 = vmatpush1.msra.mxu0 0.0
    %519 = vmatprep.subr.mxu0 0.0
    %520 = vmatpush1.msra.mxu0 0.0
    %521 = vmatprep.subr.mxu0 0.0
    %522 = vmatpush1.msra.mxu0 0.0
    %523 = vmatprep.subr.mxu0 0.0
    %524 = vmatpush1.msra.mxu0 0.0
    %525 = vmatprep.subr.mxu0 0.0
    %526 = vmatpush1.msra.mxu0 0.0
    %527 = vmatprep.subr.mxu0 0.0
    %528 = vmatpush1.msra.mxu0 0.0
    %529 = vmatprep.mubr.f32.mxu0 0.0
    %530 = vmatmul.mubr.f32.gmra.mrb[0].mxu0 %v463
    %v531 = vpop.f32.mrb[0].mxu0
    %v532 = vadd.f32 0.0, %v531
    %v533 = vpop.f32.mrb[0].mxu0
    %534 = vdwg.mxu0
    %v535 = vadd.f32 %v459, %v532
    %v536 = vxor.u32 %v535, 2147483648
    %v537 = vmul.f32 %v536, 1.442695
    %v538 = vpow.pop %v537
    %v539 = vadd.f32 %v538, 1.0
    %v540 = vrcp.pop %v539
    %v541 = vmul.f32 1.0, %v540
    %v542 = vtanh.pop %v535
    %v543 = vmul.f32 %v541, %v457
    %545 = vrot.lane.b32.xlu0 %v542, 64
    %v546 = vpop.permute.xlu0 %545
    %v548 = vmul.f32 %v541, %v546
    %550 = vrot.lane.b32.xlu0 %v548, 32
    %v551 = vpop.permute.xlu0 %550
    %v553 = vadd.f32 %v543, %v551
    %v554 = vtanh.pop %v553
    %556 = vrot.lane.b32.xlu0 %v554, 64
    %v557 = vpop.permute.xlu0 %556
    %v559 = vmul.f32 %v541, %v557
    %vm560 = vcmp.gt.s32.totalorder %v57, 3
    %v561 = vsel %vm560, 1, 0
    %562 = vset.pattern.permute.xlu0 0
    %563 = vperm.xlu0 %562, %v561
    %v564 = vpop.permute.xlu0 %563
    %vm565 = vcmp.eq.s32.totalorder %v564, 1
    %v566 = vsel %vm565, %v559, %v456
    %v567 = vsel %vm565, %v553, %v457
    %s568 = scalar_lea.vmem [#allocation2], 32
    %v569 = vld [vmem:[%s568] sm:$0xff]
    %571 = vrot.lane.b32.xlu0 %v566, 32
    %v572 = vpop.permute.xlu0 %571
    %v573 = vsel %vm131, %v572, 0
    %575 = vmatprep.subr.mxu0 0.0
    %576 = vmatpush1.msra.mxu0 %v53
    %577 = vmatprep.subr.mxu0 0.0
    %578 = vmatpush1.msra.mxu0 %v54
    %579 = vmatprep.subr.mxu0 0.0
    %580 = vmatpush1.msra.mxu0 %v55
    %581 = vmatprep.subr.mxu0 0.0
    %582 = vmatpush1.msra.mxu0 %v56
    %583 = vmatprep.subr.mxu0 0.0
    %584 = vmatpush1.msra.mxu0 0.0
    %585 = vmatprep.subr.mxu0 0.0
    %586 = vmatpush1.msra.mxu0 0.0
    %587 = vmatprep.subr.mxu0 0.0
    %588 = vmatpush1.msra.mxu0 0.0
    %589 = vmatprep.subr.mxu0 0.0
    %590 = vmatpush1.msra.mxu0 0.0
    %591 = vmatprep.subr.mxu0 0.0
    %592 = vmatpush1.msra.mxu0 0.0
    %593 = vmatprep.subr.mxu0 0.0
    %594 = vmatpush1.msra.mxu0 0.0
    %595 = vmatprep.subr.mxu0 0.0
    %596 = vmatpush1.msra.mxu0 0.0
    %597 = vmatprep.subr.mxu0 0.0
    %598 = vmatpush1.msra.mxu0 0.0
    %599 = vmatprep.subr.mxu0 0.0
    %600 = vmatpush1.msra.mxu0 0.0
    %601 = vmatprep.subr.mxu0 0.0
    %602 = vmatpush1.msra.mxu0 0.0
    %603 = vmatprep.subr.mxu0 0.0
    %604 = vmatpush1.msra.mxu0 0.0
    %605 = vmatprep.subr.mxu0 0.0
    %606 = vmatpush1.msra.mxu0 0.0
    %607 = vmatprep.subr.mxu0 0.0
    %608 = vmatpush1.msra.mxu0 0.0
    %609 = vmatprep.subr.mxu0 0.0
    %610 = vmatpush1.msra.mxu0 0.0
    %611 = vmatprep.subr.mxu0 0.0
    %612 = vmatpush1.msra.mxu0 0.0
    %613 = vmatprep.subr.mxu0 0.0
    %614 = vmatpush1.msra.mxu0 0.0
    %615 = vmatprep.subr.mxu0 0.0
    %616 = vmatpush1.msra.mxu0 0.0
    %617 = vmatprep.subr.mxu0 0.0
    %618 = vmatpush1.msra.mxu0 0.0
    %619 = vmatprep.subr.mxu0 0.0
    %620 = vmatpush1.msra.mxu0 0.0
    %621 = vmatprep.subr.mxu0 0.0
    %622 = vmatpush1.msra.mxu0 0.0
    %623 = vmatprep.subr.mxu0 0.0
    %624 = vmatpush1.msra.mxu0 0.0
    %625 = vmatprep.subr.mxu0 0.0
    %626 = vmatpush1.msra.mxu0 0.0
    %627 = vmatprep.subr.mxu0 0.0
    %628 = vmatpush1.msra.mxu0 0.0
    %629 = vmatprep.subr.mxu0 0.0
    %630 = vmatpush1.msra.mxu0 0.0
    %631 = vmatprep.subr.mxu0 0.0
    %632 = vmatpush1.msra.mxu0 0.0
    %633 = vmatprep.subr.mxu0 0.0
    %634 = vmatpush1.msra.mxu0 0.0
    %635 = vmatprep.subr.mxu0 0.0
    %636 = vmatpush1.msra.mxu0 0.0
    %637 = vmatprep.subr.mxu0 0.0
    %638 = vmatpush1.msra.mxu0 0.0
    %639 = vmatprep.mubr.f32.mxu0 0.0
    %640 = vmatmul.mubr.f32.gmra.mrb[0].mxu0 %v573
    %v641 = vpop.f32.mrb[0].mxu0
    %v642 = vadd.f32 0.0, %v641
    %v643 = vpop.f32.mrb[0].mxu0
    %644 = vdwg.mxu0
    %v645 = vadd.f32 %v569, %v642
    %v646 = vxor.u32 %v645, 2147483648
    %v647 = vmul.f32 %v646, 1.442695
    %v648 = vpow.pop %v647
    %v649 = vadd.f32 %v648, 1.0
    %v650 = vrcp.pop %v649
    %v651 = vmul.f32 1.0, %v650
    %v652 = vtanh.pop %v645
    %v653 = vmul.f32 %v651, %v567
    %655 = vrot.lane.b32.xlu0 %v652, 64
    %v656 = vpop.permute.xlu0 %655
    %v658 = vmul.f32 %v651, %v656
    %660 = vrot.lane.b32.xlu0 %v658, 32
    %v661 = vpop.permute.xlu0 %660
    %v663 = vadd.f32 %v653, %v661
    %v664 = vtanh.pop %v663
    %666 = vrot.lane.b32.xlu0 %v664, 64
    %v667 = vpop.permute.xlu0 %666
    %v669 = vmul.f32 %v651, %v667
    %vm670 = vcmp.gt.s32.totalorder %v57, 4
    %v671 = vsel %vm670, 1, 0
    %672 = vset.pattern.permute.xlu0 0
    %673 = vperm.xlu0 %672, %v671
    %v674 = vpop.permute.xlu0 %673
    %vm675 = vcmp.eq.s32.totalorder %v674, 1
    %v676 = vsel %vm675, %v669, %v566
    %v677 = vsel %vm675, %v663, %v567
    %s678 = scalar_lea.vmem [#allocation2], 40
    %v679 = vld [vmem:[%s678] sm:$0xff]
    %681 = vrot.lane.b32.xlu0 %v676, 32
    %v682 = vpop.permute.xlu0 %681
    %v683 = vsel %vm131, %v682, 0
    %685 = vmatprep.subr.mxu0 0.0
    %686 = vmatpush1.msra.mxu0 %v53
    %687 = vmatprep.subr.mxu0 0.0
    %688 = vmatpush1.msra.mxu0 %v54
    %689 = vmatprep.subr.mxu0 0.0
    %690 = vmatpush1.msra.mxu0 %v55
    %691 = vmatprep.subr.mxu0 0.0
    %692 = vmatpush1.msra.mxu0 %v56
    %693 = vmatprep.subr.mxu0 0.0
    %694 = vmatpush1.msra.mxu0 0.0
    %695 = vmatprep.subr.mxu0 0.0
    %696 = vmatpush1.msra.mxu0 0.0
    %697 = vmatprep.subr.mxu0 0.0
    %698 = vmatpush1.msra.mxu0 0.0
    %699 = vmatprep.subr.mxu0 0.0
    %700 = vmatpush1.msra.mxu0 0.0
    %701 = vmatprep.subr.mxu0 0.0
    %702 = vmatpush1.msra.mxu0 0.0
    %703 = vmatprep.subr.mxu0 0.0
    %704 = vmatpush1.msra.mxu0 0.0
    %705 = vmatprep.subr.mxu0 0.0
    %706 = vmatpush1.msra.mxu0 0.0
    %707 = vmatprep.subr.mxu0 0.0
    %708 = vmatpush1.msra.mxu0 0.0
    %709 = vmatprep.subr.mxu0 0.0
    %710 = vmatpush1.msra.mxu0 0.0
    %711 = vmatprep.subr.mxu0 0.0
    %712 = vmatpush1.msra.mxu0 0.0
    %713 = vmatprep.subr.mxu0 0.0
    %714 = vmatpush1.msra.mxu0 0.0
    %715 = vmatprep.subr.mxu0 0.0
    %716 = vmatpush1.msra.mxu0 0.0
    %717 = vmatprep.subr.mxu0 0.0
    %718 = vmatpush1.msra.mxu0 0.0
    %719 = vmatprep.subr.mxu0 0.0
    %720 = vmatpush1.msra.mxu0 0.0
    %721 = vmatprep.subr.mxu0 0.0
    %722 = vmatpush1.msra.mxu0 0.0
    %723 = vmatprep.subr.mxu0 0.0
    %724 = vmatpush1.msra.mxu0 0.0
    %725 = vmatprep.subr.mxu0 0.0
    %726 = vmatpush1.msra.mxu0 0.0
    %727 = vmatprep.subr.mxu0 0.0
    %728 = vmatpush1.msra.mxu0 0.0
    %729 = vmatprep.subr.mxu0 0.0
    %730 = vmatpush1.msra.mxu0 0.0
    %731 = vmatprep.subr.mxu0 0.0
    %732 = vmatpush1.msra.mxu0 0.0
    %733 = vmatprep.subr.mxu0 0.0
    %734 = vmatpush1.msra.mxu0 0.0
    %735 = vmatprep.subr.mxu0 0.0
    %736 = vmatpush1.msra.mxu0 0.0
    %737 = vmatprep.subr.mxu0 0.0
    %738 = vmatpush1.msra.mxu0 0.0
    %739 = vmatprep.subr.mxu0 0.0
    %740 = vmatpush1.msra.mxu0 0.0
    %741 = vmatprep.subr.mxu0 0.0
    %742 = vmatpush1.msra.mxu0 0.0
    %743 = vmatprep.subr.mxu0 0.0
    %744 = vmatpush1.msra.mxu0 0.0
    %745 = vmatprep.subr.mxu0 0.0
    %746 = vmatpush1.msra.mxu0 0.0
    %747 = vmatprep.subr.mxu0 0.0
    %748 = vmatpush1.msra.mxu0 0.0
    %749 = vmatprep.mubr.f32.mxu0 0.0
    %750 = vmatmul.mubr.f32.gmra.mrb[0].mxu0 %v683
    %v751 = vpop.f32.mrb[0].mxu0
    %v752 = vadd.f32 0.0, %v751
    %v753 = vpop.f32.mrb[0].mxu0
    %754 = vdwg.mxu0
    %v755 = vadd.f32 %v679, %v752
    %v756 = vxor.u32 %v755, 2147483648
    %v757 = vmul.f32 %v756, 1.442695
    %v758 = vpow.pop %v757
    %v759 = vadd.f32 %v758, 1.0
    %v760 = vrcp.pop %v759
    %v761 = vmul.f32 1.0, %v760
    %v762 = vtanh.pop %v755
    %v763 = vmul.f32 %v761, %v677
    %765 = vrot.lane.b32.xlu0 %v762, 64
    %v766 = vpop.permute.xlu0 %765
    %v768 = vmul.f32 %v761, %v766
    %770 = vrot.lane.b32.xlu0 %v768, 32
    %v771 = vpop.permute.xlu0 %770
    %v773 = vadd.f32 %v763, %v771
    %v774 = vtanh.pop %v773
    %776 = vrot.lane.b32.xlu0 %v774, 64
    %v777 = vpop.permute.xlu0 %776
    %v779 = vmul.f32 %v761, %v777
    %vm780 = vcmp.gt.s32.totalorder %v57, 5
    %v781 = vsel %vm780, 1, 0
    %782 = vset.pattern.permute.xlu0 0
    %783 = vperm.xlu0 %782, %v781
    %v784 = vpop.permute.xlu0 %783
    %vm785 = vcmp.eq.s32.totalorder %v784, 1
    %v786 = vsel %vm785, %v779, %v676
    %v787 = vsel %vm785, %v773, %v677
    %s788 = scalar_lea.vmem [#allocation2], 48
    %v789 = vld [vmem:[%s788] sm:$0xff]
    %791 = vrot.lane.b32.xlu0 %v786, 32
    %v792 = vpop.permute.xlu0 %791
    %v793 = vsel %vm131, %v792, 0
    %795 = vmatprep.subr.mxu0 0.0
    %796 = vmatpush1.msra.mxu0 %v53
    %797 = vmatprep.subr.mxu0 0.0
    %798 = vmatpush1.msra.mxu0 %v54
    %799 = vmatprep.subr.mxu0 0.0
    %800 = vmatpush1.msra.mxu0 %v55
    %801 = vmatprep.subr.mxu0 0.0
    %802 = vmatpush1.msra.mxu0 %v56
    %803 = vmatprep.subr.mxu0 0.0
    %804 = vmatpush1.msra.mxu0 0.0
    %805 = vmatprep.subr.mxu0 0.0
    %806 = vmatpush1.msra.mxu0 0.0
    %807 = vmatprep.subr.mxu0 0.0
    %808 = vmatpush1.msra.mxu0 0.0
    %809 = vmatprep.subr.mxu0 0.0
    %810 = vmatpush1.msra.mxu0 0.0
    %811 = vmatprep.subr.mxu0 0.0
    %812 = vmatpush1.msra.mxu0 0.0
    %813 = vmatprep.subr.mxu0 0.0
    %814 = vmatpush1.msra.mxu0 0.0
    %815 = vmatprep.subr.mxu0 0.0
    %816 = vmatpush1.msra.mxu0 0.0
    %817 = vmatprep.subr.mxu0 0.0
    %818 = vmatpush1.msra.mxu0 0.0
    %819 = vmatprep.subr.mxu0 0.0
    %820 = vmatpush1.msra.mxu0 0.0
    %821 = vmatprep.subr.mxu0 0.0
    %822 = vmatpush1.msra.mxu0 0.0
    %823 = vmatprep.subr.mxu0 0.0
    %824 = vmatpush1.msra.mxu0 0.0
    %825 = vmatprep.subr.mxu0 0.0
    %826 = vmatpush1.msra.mxu0 0.0
    %827 = vmatprep.subr.mxu0 0.0
    %828 = vmatpush1.msra.mxu0 0.0
    %829 = vmatprep.subr.mxu0 0.0
    %830 = vmatpush1.msra.mxu0 0.0
    %831 = vmatprep.subr.mxu0 0.0
    %832 = vmatpush1.msra.mxu0 0.0
    %833 = vmatprep.subr.mxu0 0.0
    %834 = vmatpush1.msra.mxu0 0.0
    %835 = vmatprep.subr.mxu0 0.0
    %836 = vmatpush1.msra.mxu0 0.0
    %837 = vmatprep.subr.mxu0 0.0
    %838 = vmatpush1.msra.mxu0 0.0
    %839 = vmatprep.subr.mxu0 0.0
    %840 = vmatpush1.msra.mxu0 0.0
    %841 = vmatprep.subr.mxu0 0.0
    %842 = vmatpush1.msra.mxu0 0.0
    %843 = vmatprep.subr.mxu0 0.0
    %844 = vmatpush1.msra.mxu0 0.0
    %845 = vmatprep.subr.mxu0 0.0
    %846 = vmatpush1.msra.mxu0 0.0
    %847 = vmatprep.subr.mxu0 0.0
    %848 = vmatpush1.msra.mxu0 0.0
    %849 = vmatprep.subr.mxu0 0.0
    %850 = vmatpush1.msra.mxu0 0.0
    %851 = vmatprep.subr.mxu0 0.0
    %852 = vmatpush1.msra.mxu0 0.0
    %853 = vmatprep.subr.mxu0 0.0
    %854 = vmatpush1.msra.mxu0 0.0
    %855 = vmatprep.subr.mxu0 0.0
    %856 = vmatpush1.msra.mxu0 0.0
    %857 = vmatprep.subr.mxu0 0.0
    %858 = vmatpush1.msra.mxu0 0.0
    %859 = vmatprep.mubr.f32.mxu0 0.0
    %860 = vmatmul.mubr.f32.gmra.mrb[0].mxu0 %v793
    %v861 = vpop.f32.mrb[0].mxu0
    %v862 = vadd.f32 0.0, %v861
    %v863 = vpop.f32.mrb[0].mxu0
    %864 = vdwg.mxu0
    %v865 = vadd.f32 %v789, %v862
    %v866 = vxor.u32 %v865, 2147483648
    %v867 = vmul.f32 %v866, 1.442695
    %v868 = vpow.pop %v867
    %v869 = vadd.f32 %v868, 1.0
    %v870 = vrcp.pop %v869
    %v871 = vmul.f32 1.0, %v870
    %v872 = vtanh.pop %v865
    %v873 = vmul.f32 %v871, %v787
    %875 = vrot.lane.b32.xlu0 %v872, 64
    %v876 = vpop.permute.xlu0 %875
    %v878 = vmul.f32 %v871, %v876
    %880 = vrot.lane.b32.xlu0 %v878, 32
    %v881 = vpop.permute.xlu0 %880
    %v883 = vadd.f32 %v873, %v881
    %v884 = vtanh.pop %v883
    %886 = vrot.lane.b32.xlu0 %v884, 64
    %v887 = vpop.permute.xlu0 %886
    %v889 = vmul.f32 %v871, %v887
    %vm890 = vcmp.gt.s32.totalorder %v57, 6
    %v891 = vsel %vm890, 1, 0
    %892 = vset.pattern.permute.xlu0 0
    %893 = vperm.xlu0 %892, %v891
    %v894 = vpop.permute.xlu0 %893
    %vm895 = vcmp.eq.s32.totalorder %v894, 1
    %v896 = vsel %vm895, %v889, %v786
    %v897 = vsel %vm895, %v883, %v787
    %s898 = scalar_lea.vmem [#allocation2], 56
    %v899 = vld [vmem:[%s898] sm:$0xff]
    %901 = vrot.lane.b32.xlu0 %v896, 32
    %v902 = vpop.permute.xlu0 %901
    %v903 = vsel %vm131, %v902, 0
    %905 = vmatprep.subr.mxu0 0.0
    %906 = vmatpush1.msra.mxu0 %v53
    %907 = vmatprep.subr.mxu0 0.0
    %908 = vmatpush1.msra.mxu0 %v54
    %909 = vmatprep.subr.mxu0 0.0
    %910 = vmatpush1.msra.mxu0 %v55
    %911 = vmatprep.subr.mxu0 0.0
    %912 = vmatpush1.msra.mxu0 %v56
    %913 = vmatprep.subr.mxu0 0.0
    %914 = vmatpush1.msra.mxu0 0.0
    %915 = vmatprep.subr.mxu0 0.0
    %916 = vmatpush1.msra.mxu0 0.0
    %917 = vmatprep.subr.mxu0 0.0
    %918 = vmatpush1.msra.mxu0 0.0
    %919 = vmatprep.subr.mxu0 0.0
    %920 = vmatpush1.msra.mxu0 0.0
    %921 = vmatprep.subr.mxu0 0.0
    %922 = vmatpush1.msra.mxu0 0.0
    %923 = vmatprep.subr.mxu0 0.0
    %924 = vmatpush1.msra.mxu0 0.0
    %925 = vmatprep.subr.mxu0 0.0
    %926 = vmatpush1.msra.mxu0 0.0
    %927 = vmatprep.subr.mxu0 0.0
    %928 = vmatpush1.msra.mxu0 0.0
    %929 = vmatprep.subr.mxu0 0.0
    %930 = vmatpush1.msra.mxu0 0.0
    %931 = vmatprep.subr.mxu0 0.0
    %932 = vmatpush1.msra.mxu0 0.0
    %933 = vmatprep.subr.mxu0 0.0
    %934 = vmatpush1.msra.mxu0 0.0
    %935 = vmatprep.subr.mxu0 0.0
    %936 = vmatpush1.msra.mxu0 0.0
    %937 = vmatprep.subr.mxu0 0.0
    %938 = vmatpush1.msra.mxu0 0.0
    %939 = vmatprep.subr.mxu0 0.0
    %940 = vmatpush1.msra.mxu0 0.0
    %941 = vmatprep.subr.mxu0 0.0
    %942 = vmatpush1.msra.mxu0 0.0
    %943 = vmatprep.subr.mxu0 0.0
    %944 = vmatpush1.msra.mxu0 0.0
    %945 = vmatprep.subr.mxu0 0.0
    %946 = vmatpush1.msra.mxu0 0.0
    %947 = vmatprep.subr.mxu0 0.0
    %948 = vmatpush1.msra.mxu0 0.0
    %949 = vmatprep.subr.mxu0 0.0
    %950 = vmatpush1.msra.mxu0 0.0
    %951 = vmatprep.subr.mxu0 0.0
    %952 = vmatpush1.msra.mxu0 0.0
    %953 = vmatprep.subr.mxu0 0.0
    %954 = vmatpush1.msra.mxu0 0.0
    %955 = vmatprep.subr.mxu0 0.0
    %956 = vmatpush1.msra.mxu0 0.0
    %957 = vmatprep.subr.mxu0 0.0
    %958 = vmatpush1.msra.mxu0 0.0
    %959 = vmatprep.subr.mxu0 0.0
    %960 = vmatpush1.msra.mxu0 0.0
    %961 = vmatprep.subr.mxu0 0.0
    %962 = vmatpush1.msra.mxu0 0.0
    %963 = vmatprep.subr.mxu0 0.0
    %964 = vmatpush1.msra.mxu0 0.0
    %965 = vmatprep.subr.mxu0 0.0
    %966 = vmatpush1.msra.mxu0 0.0
    %967 = vmatprep.subr.mxu0 0.0
    %968 = vmatpush1.msra.mxu0 0.0
    %969 = vmatprep.mubr.f32.mxu0 0.0
    %970 = vmatmul.mubr.f32.gmra.mrb[0].mxu0 %v903
    %v971 = vpop.f32.mrb[0].mxu0
    %v972 = vadd.f32 0.0, %v971
    %v973 = vpop.f32.mrb[0].mxu0
    %974 = vdwg.mxu0
    %v975 = vadd.f32 %v899, %v972
    %v976 = vxor.u32 %v975, 2147483648
    %v977 = vmul.f32 %v976, 1.442695
    %v978 = vpow.pop %v977
    %v979 = vadd.f32 %v978, 1.0
    %v980 = vrcp.pop %v979
    %v981 = vmul.f32 1.0, %v980
    %v982 = vtanh.pop %v975
    %v983 = vmul.f32 %v981, %v897
    %985 = vrot.lane.b32.xlu0 %v982, 64
    %v986 = vpop.permute.xlu0 %985
    %v988 = vmul.f32 %v981, %v986
    %990 = vrot.lane.b32.xlu0 %v988, 32
    %v991 = vpop.permute.xlu0 %990
    %v993 = vadd.f32 %v983, %v991
    %v994 = vtanh.pop %v993
    %996 = vrot.lane.b32.xlu0 %v994, 64
    %v997 = vpop.permute.xlu0 %996
    %v999 = vmul.f32 %v981, %v997
    %vm1000 = vcmp.gt.s32.totalorder %v57, 7
    %v1001 = vsel %vm1000, 1, 0
    %1002 = vset.pattern.permute.xlu0 0
    %1003 = vperm.xlu0 %1002, %v1001
    %v1004 = vpop.permute.xlu0 %1003
    %vm1005 = vcmp.eq.s32.totalorder %v1004, 1
    %v1006 = vsel %vm1005, %v999, %v896
    %v1007 = vld [vmem:[%s4] sm:$0xff]
    %v1008 = vld [vmem:[%s4 + $0x8] sm:$0xff]
    %v1009 = vld [vmem:[%s4 + $0x10] sm:$0xff]
    %v1010 = vld [vmem:[%s4 + $0x18] sm:$0xff]
    %v1011 = vld [vmem:[%s5] sm:$0x1]
    %v1013 = vlaneseq
    %v1014 = vshrl.u32 %v1013, 7
    %v1015 = vsub.s32 0, %v1014
    %v1016 = vrot.slane %v1011, %v1015
    %1019 = vrot.lane.b32.xlu0 %v1006, 32
    %v1020 = vpop.permute.xlu0 %1019
    %v1021 = vsel %vm131, %v1020, 0
    %1023 = vmatprep.subr.mxu0 0.0
    %1024 = vmatpush1.msra.mxu0 %v1007
    %1025 = vmatprep.subr.mxu0 0.0
    %1026 = vmatpush1.msra.mxu0 %v1008
    %1027 = vmatprep.subr.mxu0 0.0
    %1028 = vmatpush1.msra.mxu0 %v1009
    %1029 = vmatprep.subr.mxu0 0.0
    %1030 = vmatpush1.msra.mxu0 %v1010
    %1031 = vmatprep.subr.mxu0 0.0
    %1032 = vmatpush1.msra.mxu0 0.0
    %1033 = vmatprep.subr.mxu0 0.0
    %1034 = vmatpush1.msra.mxu0 0.0
    %1035 = vmatprep.subr.mxu0 0.0
    %1036 = vmatpush1.msra.mxu0 0.0
    %1037 = vmatprep.subr.mxu0 0.0
    %1038 = vmatpush1.msra.mxu0 0.0
    %1039 = vmatprep.subr.mxu0 0.0
    %1040 = vmatpush1.msra.mxu0 0.0
    %1041 = vmatprep.subr.mxu0 0.0
    %1042 = vmatpush1.msra.mxu0 0.0
    %1043 = vmatprep.subr.mxu0 0.0
    %1044 = vmatpush1.msra.mxu0 0.0
    %1045 = vmatprep.subr.mxu0 0.0
    %1046 = vmatpush1.msra.mxu0 0.0
    %1047 = vmatprep.subr.mxu0 0.0
    %1048 = vmatpush1.msra.mxu0 0.0
    %1049 = vmatprep.subr.mxu0 0.0
    %1050 = vmatpush1.msra.mxu0 0.0
    %1051 = vmatprep.subr.mxu0 0.0
    %1052 = vmatpush1.msra.mxu0 0.0
    %1053 = vmatprep.subr.mxu0 0.0
    %1054 = vmatpush1.msra.mxu0 0.0
    %1055 = vmatprep.subr.mxu0 0.0
    %1056 = vmatpush1.msra.mxu0 0.0
    %1057 = vmatprep.subr.mxu0 0.0
    %1058 = vmatpush1.msra.mxu0 0.0
    %1059 = vmatprep.subr.mxu0 0.0
    %1060 = vmatpush1.msra.mxu0 0.0
    %1061 = vmatprep.subr.mxu0 0.0
    %1062 = vmatpush1.msra.mxu0 0.0
    %1063 = vmatprep.subr.mxu0 0.0
    %1064 = vmatpush1.msra.mxu0 0.0
    %1065 = vmatprep.subr.mxu0 0.0
    %1066 = vmatpush1.msra.mxu0 0.0
    %1067 = vmatprep.subr.mxu0 0.0
    %1068 = vmatpush1.msra.mxu0 0.0
    %1069 = vmatprep.subr.mxu0 0.0
    %1070 = vmatpush1.msra.mxu0 0.0
    %1071 = vmatprep.subr.mxu0 0.0
    %1072 = vmatpush1.msra.mxu0 0.0
    %1073 = vmatprep.subr.mxu0 0.0
    %1074 = vmatpush1.msra.mxu0 0.0
    %1075 = vmatprep.subr.mxu0 0.0
    %1076 = vmatpush1.msra.mxu0 0.0
    %1077 = vmatprep.subr.mxu0 0.0
    %1078 = vmatpush1.msra.mxu0 0.0
    %1079 = vmatprep.subr.mxu0 0.0
    %1080 = vmatpush1.msra.mxu0 0.0
    %1081 = vmatprep.subr.mxu0 0.0
    %1082 = vmatpush1.msra.mxu0 0.0
    %1083 = vmatprep.subr.mxu0 0.0
    %1084 = vmatpush1.msra.mxu0 0.0
    %1085 = vmatprep.subr.mxu0 0.0
    %1086 = vmatpush1.msra.mxu0 0.0
    %1087 = vmatprep.mubr.f32.mxu0 0.0
    %1088 = vmatmul.mubr.f32.gmra.mrb[0].mxu0 %v1021
    %v1089 = vpop.f32.mrb[0].mxu0
    %v1090 = vadd.f32 %v1016, %v1089
    %v1091 = vpop.f32.mrb[0].mxu0
    %1092 = vdwg.mxu0
    %1093 = vmax.xlane.f32.xlu0 %v1090
    %v1094 = vpop.xlane.xlu0 %1093
    %v1095 = vsub.f32 %v1090, %v1094
    %v1096 = vmul.f32 %v1095, 1.442695
    %v1097 = vpow.pop %v1096
    %1098 = vadd.xlane.f32.xlu0 %v1097
    %v1099 = vpop.xlane.xlu0 %1098
    %v1100 = vlog2.pop %v1099
    %v1101 = vmul.f32 %v1100, 0.6931472
    %v1102 = vsub.f32 %v1095, %v1101
    %1103 = vst [vmem:[%s6] sm:$0xff] %v1102
    // Predicated region
    $region30: #{lstm_forward.1} parent=1 // pred_check
      _
    $region31: #{lstm_forward.1} parent=1 // pred_check_branch
      %1105 = sbr.rel (0) target = $region33
    $region32: #{lstm_forward.1} parent=1 // pred_region
      _
    $region33: #{lstm_forward.1} parent=1 // pred_fallthru
      _
    // Predicated region
    $region34: #{lstm_forward.1} parent=1 // pred_check
      _
    $region35: #{lstm_forward.1} parent=1 // pred_check_branch
      %1107 = sbr.rel (0) target = $region37
    $region36: #{lstm_forward.1} parent=1 // pred_region
      _
    $region37: #{lstm_forward.1} parent=1 // pred_fallthru
      _
    %1108 = vsyncpa [#allocation6], 1
    %1109 = vsyncpa [#allocation8], 1

</llo_original>
